<compile_context>
chip_gen: v7x
topology: tpu7x:2x2x1
jax: 0.10.0
libtpu: 0.0.40
codegen_flags: <defaults>
</compile_context>

<pallas_src>
import numpy as np

import jax
import jax.numpy as jnp
from jax import lax
from jax.experimental import pallas as pl
from jax.experimental.pallas import tpu as pltpu


def _make_mean_field_kernel(H, W, C, B, K, theta0, theta1, alpha0, base, n_iter):
    HW = H * W
    pad = K // 2
    KK = K * K
    inv_2t0 = 1.0 / (2.0 * theta0 * theta0)

    # -log(p) only ever takes two values because p in {base, 1-base}:
    #   L0 = -log(base), L1 = -log(1-base), D = L0 - L1 = log((1-base)/base).
    # With af = L0*S - D*A and ab = L1*S + D*A (S = sum of masked kernel taps,
    # A = kernel-weighted sum of the shifted fg mask), the reference update
    #   new_fg = (exp(-af)*tgt > exp(-ab))
    # is exactly   A > S/2 - log(tgt)/(2*D)   for tgt > 0 (and False otherwise).
    L0 = -float(np.log(base))
    L1 = -float(np.log(1.0 - base))
    D = L0 - L1
    if D <= 0.0:
        raise NotImplementedError("MeanField kernel assumes base < 0.5")
    half_over_d = 0.5 / D
    BIG = 3.0e38

    # Tap offsets (oy, ox) and their roll shifts along the flattened H*W axis.
    taps = []
    for k in range(KK):
        oy = k // K - pad
        ox = k % K - pad
        shift = (-(oy * W + ox)) % HW
        taps.append((oy, ox, shift))

    def kernel(wmask_ref, fmap_ref, x_ref, t_ref, out_ref, ker_ref, thr_ref):
        f32 = jnp.float32
        tgt = t_ref[0]                                   # (B, HW)

        # ---- bilateral kernel (reference __init__ "self.kernel"), built once
        # per grid step.  wmask_ref[k] already carries
        #   alpha0 * exp(-spatial_k / (2*theta1^2)) * (tap k is in-bounds),
        # so out-of-range taps (Unfold zero padding) are exactly zero and roll
        # wrap-around never leaks across row/instance boundaries.
        # (The reference's `feature_map + 10` only affects those masked taps
        #  and is therefore dropped.)
        ksum = jnp.zeros((B, HW), f32)
        for k, (oy, ox, shift) in enumerate(taps):
            sq = jnp.zeros((B, HW), f32)
            if shift:
                for c in range(C):
                    ctr = fmap_ref[0, c]                 # (B, HW)
                    d = pltpu.roll(ctr, shift, axis=1) - ctr
                    sq = sq + d * d
            kerk = (wmask_ref[k] * jnp.exp(-sq * inv_2t0)).astype(f32)
            ker_ref[k] = kerk
            ksum = ksum + kerk

        # ---- loop-invariant decision threshold (folds targets + base in).
        thr_ref[...] = jnp.where(
            tgt > 0.0,
            0.5 * ksum - jnp.log(jnp.maximum(tgt, 1e-30)) * half_over_d,
            BIG).astype(f32)

        # ---- unary init: fg mask = (x * targets > 0.5)
        m0 = jnp.where(x_ref[0] * tgt > 0.5, 1.0, 0.0).astype(f32)

        # ---- mean-field iterations: one 9-tap weighted sum + compare each.
        def body(_, m):
            acc = jnp.zeros((B, HW), f32)
            for k, (oy, ox, shift) in enumerate(taps):
                t = m if shift == 0 else pltpu.roll(m, shift, axis=1)
                acc = acc + ker_ref[k] * t
            return jnp.where(acc > thr_ref[...], 1.0, 0.0).astype(f32)

        m = lax.fori_loop(0, n_iter, body, m0)

        # ---- ret = (fg prob > 0.5), which is just the final binary mask.
        out_ref[0] = m

    return kernel


def mean_field_forward(x, targets, feature_map, *, kernel_size=3, theta0=0.5,
                       theta1=30.0, theta2=10.0, alpha0=3.0, n_iter=20,
                       base=0.45, gamma=0.01):
    """JAX/Pallas equivalent of MeanField(feature_map).forward(x, targets)."""
    del theta2, gamma  # only referenced by the inter_img_mask branch
    # TODO(synk): inter_img_mask branch not implemented (reference forward defaults it to None).
    N, _, H, W = x.shape
    C = feature_map.shape[1]
    HW = H * W
    K = kernel_size
    KK = K * K
    pad = K // 2

    # Pack up to 8 instances per grid step along the sublane axis; flatten the
    # (H, W) plane onto the lane axis (lane-dense even for small RoIs).
    B = max(1, min(N, 8))
    n_chunks = max(1, -(-N // B))
    N_pad = n_chunks * B

    def pack(a, ch):                      # (N, ch, H, W) -> (n_chunks, ch, B, HW)
        a = a.astype(jnp.float32).reshape(N, ch, HW)
        a = jnp.pad(a, ((0, N_pad - N), (0, 0), (0, 0)))
        return a.reshape(n_chunks, B, ch, HW).transpose(0, 2, 1, 3)

    fmap_p = pack(feature_map, C)                        # (n_chunks, C, B, HW)
    x_p = pack(x, 1)[:, 0]                               # (n_chunks, B, HW)
    t_p = pack(targets, 1)[:, 0]                         # (n_chunks, B, HW)

    # Per-tap constant plane: alpha0 * exp(-spatial/(2*theta1^2)), masked to the
    # taps that torch.nn.Unfold would fill with real (non-padding) data.
    hh = np.arange(HW, dtype=np.int64) // W
    ww = np.arange(HW, dtype=np.int64) % W
    inv_2t1 = 1.0 / (2.0 * theta1 * theta1)
    wm = np.zeros((KK, 1, HW), np.float32)
    for k in range(KK):
        oy = k // K - pad
        ox = k % K - pad
        valid = ((hh + oy >= 0) & (hh + oy < H) & (ww + ox >= 0) & (ww + ox < W))
        wm[k, 0] = valid.astype(np.float32) * (
            alpha0 * np.exp(-float(oy * oy + ox * ox) * inv_2t1))
    wmask = jnp.asarray(wm)

    kernel = _make_mean_field_kernel(H, W, C, B, K, theta0, theta1,
                                     alpha0, base, n_iter)

    ret_p = pl.pallas_call(
        kernel,
        out_shape=jax.ShapeDtypeStruct((n_chunks, B, HW), jnp.float32),
        grid_spec=pltpu.PrefetchScalarGridSpec(
            num_scalar_prefetch=0,
            grid=(n_chunks,),
            in_specs=[
                pl.BlockSpec((KK, 1, HW), lambda n: (0, 0, 0)),
                pl.BlockSpec((1, C, B, HW), lambda n: (n, 0, 0, 0)),
                pl.BlockSpec((1, B, HW), lambda n: (n, 0, 0)),
                pl.BlockSpec((1, B, HW), lambda n: (n, 0, 0)),
            ],
            out_specs=pl.BlockSpec((1, B, HW), lambda n: (n, 0, 0)),
            scratch_shapes=[
                pltpu.VMEM((KK, B, HW), jnp.float32),   # masked bilateral kernel taps
                pltpu.VMEM((B, HW), jnp.float32),       # decision threshold plane
            ]),
        compiler_params=pltpu.CompilerParams(
            dimension_semantics=("parallel",)),
    )(wmask, fmap_p, x_p, t_p)

    ret = ret_p.reshape(N_pad, HW)[:N].reshape(N, 1, H, W)

    # Post-processing glue: per-instance validity of the refined mask.
    count = ret.reshape(N, -1).sum(axis=1)
    hw = float(H * W)
    valid = ((count >= hw * 0.05) & (count <= hw * 0.95)).astype(jnp.float32)
    return ret, valid


if __name__ == "__main__":
    key = jax.random.PRNGKey(0)
    N, C, H, W = 2, 4, 16, 16               # N instances, C feature channels
    k1, k2 = jax.random.split(key)
    # __init__ argument: per-instance feature map (e.g. color features), NCHW
    feature_map = jax.random.uniform(k1, (N, C, H, W), dtype=jnp.float32)
    # forward arguments: mask probabilities x and box targets, both (N,1,H,W)
    x = jax.random.uniform(k2, (N, 1, H, W), dtype=jnp.float32)
    targets = jnp.zeros((N, 1, H, W), jnp.float32).at[:, :, 3:13, 4:14].set(1.0)

    ret, valid = jax.jit(mean_field_forward)(x, targets, feature_map)
    jax.block_until_ready((ret, valid))
    assert ret.shape == (N, 1, H, W) and valid.shape == (N,)
    print("KERNEL_OK")
</pallas_src>

<mosaic_0001>
module attributes {stable_mosaic.version = 11 : i64} {
  func.func @kernel(%arg0: i32, %arg1: memref<9x1x256xf32, #tpu.memory_space<vmem>>, %arg2: memref<1x4x2x256xf32, #tpu.memory_space<vmem>>, %arg3: memref<1x2x256xf32, #tpu.memory_space<vmem>>, %arg4: memref<1x2x256xf32, #tpu.memory_space<vmem>>, %arg5: memref<1x2x256xf32, #tpu.memory_space<vmem>>, %arg6: memref<9x2x256xf32, #tpu.memory_space<vmem>>, %arg7: memref<2x256xf32, #tpu.memory_space<vmem>>) attributes {dimension_semantics = [#tpu.dimension_semantics<parallel>], iteration_bounds = array<i64: 1>, scalar_prefetch = 0 : i64, scratch_operands = 2 : i64, tpu.core_type = #tpu.core_type<tc>, window_params = [{pipeline_mode = #tpu.pipeline_mode<synchronous>, transform_indices = @transform_0, window_bounds = array<i64: 9, 1, 256>}, {transform_indices = @transform_1, window_bounds = array<i64: 1, 4, 2, 256>}, {transform_indices = @transform_2, window_bounds = array<i64: 1, 2, 256>}, {transform_indices = @transform_3, window_bounds = array<i64: 1, 2, 256>}, {transform_indices = @transform_4, window_bounds = array<i64: 1, 2, 256>}]} {
    %c0 = arith.constant 0 : index
    %c0_0 = arith.constant 0 : index
    %c0_1 = arith.constant 0 : index
    %0 = vector.load %arg4[%c0, %c0_0, %c0_1] : memref<1x2x256xf32, #tpu.memory_space<vmem>>, vector<1x2x256xf32>
    %1 = vector.shape_cast %0 : vector<1x2x256xf32> to vector<2x256xf32>
    %cst = arith.constant 0.000000e+00 : f32
    %2 = vector.broadcast %cst : f32 to vector<2x256xf32>
    %cst_2 = arith.constant 0.000000e+00 : f32
    %3 = vector.broadcast %cst_2 : f32 to vector<2x256xf32>
    %c0_3 = arith.constant 0 : index
    %c0_4 = arith.constant 0 : index
    %c0_5 = arith.constant 0 : index
    %c0_6 = arith.constant 0 : index
    %4 = vector.load %arg2[%c0_3, %c0_4, %c0_5, %c0_6] : memref<1x4x2x256xf32, #tpu.memory_space<vmem>>, vector<1x1x2x256xf32>
    %5 = vector.shape_cast %4 : vector<1x1x2x256xf32> to vector<2x256xf32>
    %c17_i32 = arith.constant 17 : i32
    %6 = tpu.dynamic_rotate %5 by %c17_i32 dim 1 : vector<2x256xf32>, i32 -> vector<2x256xf32>
    %7 = arith.subf %6, %5 : vector<2x256xf32>
    %8 = arith.mulf %7, %7 : vector<2x256xf32>
    %9 = arith.addf %3, %8 : vector<2x256xf32>
    %c0_7 = arith.constant 0 : index
    %c1 = arith.constant 1 : index
    %c0_8 = arith.constant 0 : index
    %c0_9 = arith.constant 0 : index
    %10 = vector.load %arg2[%c0_7, %c1, %c0_8, %c0_9] : memref<1x4x2x256xf32, #tpu.memory_space<vmem>>, vector<1x1x2x256xf32>
    %11 = vector.shape_cast %10 : vector<1x1x2x256xf32> to vector<2x256xf32>
    %c17_i32_10 = arith.constant 17 : i32
    %12 = tpu.dynamic_rotate %11 by %c17_i32_10 dim 1 : vector<2x256xf32>, i32 -> vector<2x256xf32>
    %13 = arith.subf %12, %11 : vector<2x256xf32>
    %14 = arith.mulf %13, %13 : vector<2x256xf32>
    %15 = arith.addf %9, %14 : vector<2x256xf32>
    %c0_11 = arith.constant 0 : index
    %c2 = arith.constant 2 : index
    %c0_12 = arith.constant 0 : index
    %c0_13 = arith.constant 0 : index
    %16 = vector.load %arg2[%c0_11, %c2, %c0_12, %c0_13] : memref<1x4x2x256xf32, #tpu.memory_space<vmem>>, vector<1x1x2x256xf32>
    %17 = vector.shape_cast %16 : vector<1x1x2x256xf32> to vector<2x256xf32>
    %c17_i32_14 = arith.constant 17 : i32
    %18 = tpu.dynamic_rotate %17 by %c17_i32_14 dim 1 : vector<2x256xf32>, i32 -> vector<2x256xf32>
    %19 = arith.subf %18, %17 : vector<2x256xf32>
    %20 = arith.mulf %19, %19 : vector<2x256xf32>
    %21 = arith.addf %15, %20 : vector<2x256xf32>
    %c0_15 = arith.constant 0 : index
    %c3 = arith.constant 3 : index
    %c0_16 = arith.constant 0 : index
    %c0_17 = arith.constant 0 : index
    %22 = vector.load %arg2[%c0_15, %c3, %c0_16, %c0_17] : memref<1x4x2x256xf32, #tpu.memory_space<vmem>>, vector<1x1x2x256xf32>
    %23 = vector.shape_cast %22 : vector<1x1x2x256xf32> to vector<2x256xf32>
    %c17_i32_18 = arith.constant 17 : i32
    %24 = tpu.dynamic_rotate %23 by %c17_i32_18 dim 1 : vector<2x256xf32>, i32 -> vector<2x256xf32>
    %25 = arith.subf %24, %23 : vector<2x256xf32>
    %26 = arith.mulf %25, %25 : vector<2x256xf32>
    %27 = arith.addf %21, %26 : vector<2x256xf32>
    %c0_19 = arith.constant 0 : index
    %c0_20 = arith.constant 0 : index
    %c0_21 = arith.constant 0 : index
    %28 = vector.load %arg1[%c0_19, %c0_20, %c0_21] : memref<9x1x256xf32, #tpu.memory_space<vmem>>, vector<1x1x256xf32>
    %29 = vector.shape_cast %28 : vector<1x1x256xf32> to vector<1x256xf32>
    %cst_22 = arith.constant 0.000000e+00 : f32
    %30 = vector.broadcast %cst_22 : f32 to vector<2x256xf32>
    %31 = arith.subf %30, %27 : vector<2x256xf32>
    %cst_23 = arith.constant 2.000000e+00 : f32
    %32 = vector.broadcast %cst_23 : f32 to vector<2x256xf32>
    %33 = arith.mulf %31, %32 : vector<2x256xf32>
    %34 = math.exp %33 : vector<2x256xf32>
    %35 = vector.broadcast %29 : vector<1x256xf32> to vector<2x256xf32>
    %36 = arith.mulf %35, %34 : vector<2x256xf32>
    %c0_24 = arith.constant 0 : index
    %c0_25 = arith.constant 0 : index
    %c0_26 = arith.constant 0 : index
    %37 = vector.load %arg6[%c0_24, %c0_25, %c0_26] : memref<9x2x256xf32, #tpu.memory_space<vmem>>, vector<1x2x256xf32>
    %38 = vector.shape_cast %37 : vector<1x2x256xf32> to vector<2x256xf32>
    %39 = vector.shape_cast %36 : vector<2x256xf32> to vector<1x2x256xf32>
    tpu.vector_store %arg6[%c0_24, %c0_25, %c0_26], %39 {strides = array<i32>} : memref<9x2x256xf32, #tpu.memory_space<vmem>>, vector<1x2x256xf32>,
    %40 = arith.addf %2, %36 : vector<2x256xf32>
    %cst_27 = arith.constant 0.000000e+00 : f32
    %41 = vector.broadcast %cst_27 : f32 to vector<2x256xf32>
    %c0_28 = arith.constant 0 : index
    %c0_29 = arith.constant 0 : index
    %c0_30 = arith.constant 0 : index
    %c0_31 = arith.constant 0 : index
    %42 = vector.load %arg2[%c0_28, %c0_29, %c0_30, %c0_31] : memref<1x4x2x256xf32, #tpu.memory_space<vmem>>, vector<1x1x2x256xf32>
    %43 = vector.shape_cast %42 : vector<1x1x2x256xf32> to vector<2x256xf32>
    %c16_i32 = arith.constant 16 : i32
    %44 = tpu.dynamic_rotate %43 by %c16_i32 dim 1 : vector<2x256xf32>, i32 -> vector<2x256xf32>
    %45 = arith.subf %44, %43 : vector<2x256xf32>
    %46 = arith.mulf %45, %45 : vector<2x256xf32>
    %47 = arith.addf %41, %46 : vector<2x256xf32>
    %c0_32 = arith.constant 0 : index
    %c1_33 = arith.constant 1 : index
    %c0_34 = arith.constant 0 : index
    %c0_35 = arith.constant 0 : index
    %48 = vector.load %arg2[%c0_32, %c1_33, %c0_34, %c0_35] : memref<1x4x2x256xf32, #tpu.memory_space<vmem>>, vector<1x1x2x256xf32>
    %49 = vector.shape_cast %48 : vector<1x1x2x256xf32> to vector<2x256xf32>
    %c16_i32_36 = arith.constant 16 : i32
    %50 = tpu.dynamic_rotate %49 by %c16_i32_36 dim 1 : vector<2x256xf32>, i32 -> vector<2x256xf32>
    %51 = arith.subf %50, %49 : vector<2x256xf32>
    %52 = arith.mulf %51, %51 : vector<2x256xf32>
    %53 = arith.addf %47, %52 : vector<2x256xf32>
    %c0_37 = arith.constant 0 : index
    %c2_38 = arith.constant 2 : index
    %c0_39 = arith.constant 0 : index
    %c0_40 = arith.constant 0 : index
    %54 = vector.load %arg2[%c0_37, %c2_38, %c0_39, %c0_40] : memref<1x4x2x256xf32, #tpu.memory_space<vmem>>, vector<1x1x2x256xf32>
    %55 = vector.shape_cast %54 : vector<1x1x2x256xf32> to vector<2x256xf32>
    %c16_i32_41 = arith.constant 16 : i32
    %56 = tpu.dynamic_rotate %55 by %c16_i32_41 dim 1 : vector<2x256xf32>, i32 -> vector<2x256xf32>
    %57 = arith.subf %56, %55 : vector<2x256xf32>
    %58 = arith.mulf %57, %57 : vector<2x256xf32>
    %59 = arith.addf %53, %58 : vector<2x256xf32>
    %c0_42 = arith.constant 0 : index
    %c3_43 = arith.constant 3 : index
    %c0_44 = arith.constant 0 : index
    %c0_45 = arith.constant 0 : index
    %60 = vector.load %arg2[%c0_42, %c3_43, %c0_44, %c0_45] : memref<1x4x2x256xf32, #tpu.memory_space<vmem>>, vector<1x1x2x256xf32>
    %61 = vector.shape_cast %60 : vector<1x1x2x256xf32> to vector<2x256xf32>
    %c16_i32_46 = arith.constant 16 : i32
    %62 = tpu.dynamic_rotate %61 by %c16_i32_46 dim 1 : vector<2x256xf32>, i32 -> vector<2x256xf32>
    %63 = arith.subf %62, %61 : vector<2x256xf32>
    %64 = arith.mulf %63, %63 : vector<2x256xf32>
    %65 = arith.addf %59, %64 : vector<2x256xf32>
    %c1_47 = arith.constant 1 : index
    %c0_48 = arith.constant 0 : index
    %c0_49 = arith.constant 0 : index
    %66 = vector.load %arg1[%c1_47, %c0_48, %c0_49] : memref<9x1x256xf32, #tpu.memory_space<vmem>>, vector<1x1x256xf32>
    %67 = vector.shape_cast %66 : vector<1x1x256xf32> to vector<1x256xf32>
    %cst_50 = arith.constant 0.000000e+00 : f32
    %68 = vector.broadcast %cst_50 : f32 to vector<2x256xf32>
    %69 = arith.subf %68, %65 : vector<2x256xf32>
    %cst_51 = arith.constant 2.000000e+00 : f32
    %70 = vector.broadcast %cst_51 : f32 to vector<2x256xf32>
    %71 = arith.mulf %69, %70 : vector<2x256xf32>
    %72 = math.exp %71 : vector<2x256xf32>
    %73 = vector.broadcast %67 : vector<1x256xf32> to vector<2x256xf32>
    %74 = arith.mulf %73, %72 : vector<2x256xf32>
    %c1_52 = arith.constant 1 : index
    %c0_53 = arith.constant 0 : index
    %c0_54 = arith.constant 0 : index
    %75 = vector.load %arg6[%c1_52, %c0_53, %c0_54] : memref<9x2x256xf32, #tpu.memory_space<vmem>>, vector<1x2x256xf32>
    %76 = vector.shape_cast %75 : vector<1x2x256xf32> to vector<2x256xf32>
    %77 = vector.shape_cast %74 : vector<2x256xf32> to vector<1x2x256xf32>
    tpu.vector_store %arg6[%c1_52, %c0_53, %c0_54], %77 {strides = array<i32>} : memref<9x2x256xf32, #tpu.memory_space<vmem>>, vector<1x2x256xf32>,
    %78 = arith.addf %40, %74 : vector<2x256xf32>
    %cst_55 = arith.constant 0.000000e+00 : f32
    %79 = vector.broadcast %cst_55 : f32 to vector<2x256xf32>
    %c0_56 = arith.constant 0 : index
    %c0_57 = arith.constant 0 : index
    %c0_58 = arith.constant 0 : index
    %c0_59 = arith.constant 0 : index
    %80 = vector.load %arg2[%c0_56, %c0_57, %c0_58, %c0_59] : memref<1x4x2x256xf32, #tpu.memory_space<vmem>>, vector<1x1x2x256xf32>
    %81 = vector.shape_cast %80 : vector<1x1x2x256xf32> to vector<2x256xf32>
    %c15_i32 = arith.constant 15 : i32
    %82 = tpu.dynamic_rotate %81 by %c15_i32 dim 1 : vector<2x256xf32>, i32 -> vector<2x256xf32>
    %83 = arith.subf %82, %81 : vector<2x256xf32>
    %84 = arith.mulf %83, %83 : vector<2x256xf32>
    %85 = arith.addf %79, %84 : vector<2x256xf32>
    %c0_60 = arith.constant 0 : index
    %c1_61 = arith.constant 1 : index
    %c0_62 = arith.constant 0 : index
    %c0_63 = arith.constant 0 : index
    %86 = vector.load %arg2[%c0_60, %c1_61, %c0_62, %c0_63] : memref<1x4x2x256xf32, #tpu.memory_space<vmem>>, vector<1x1x2x256xf32>
    %87 = vector.shape_cast %86 : vector<1x1x2x256xf32> to vector<2x256xf32>
    %c15_i32_64 = arith.constant 15 : i32
    %88 = tpu.dynamic_rotate %87 by %c15_i32_64 dim 1 : vector<2x256xf32>, i32 -> vector<2x256xf32>
    %89 = arith.subf %88, %87 : vector<2x256xf32>
    %90 = arith.mulf %89, %89 : vector<2x256xf32>
    %91 = arith.addf %85, %90 : vector<2x256xf32>
    %c0_65 = arith.constant 0 : index
    %c2_66 = arith.constant 2 : index
    %c0_67 = arith.constant 0 : index
    %c0_68 = arith.constant 0 : index
    %92 = vector.load %arg2[%c0_65, %c2_66, %c0_67, %c0_68] : memref<1x4x2x256xf32, #tpu.memory_space<vmem>>, vector<1x1x2x256xf32>
    %93 = vector.shape_cast %92 : vector<1x1x2x256xf32> to vector<2x256xf32>
    %c15_i32_69 = arith.constant 15 : i32
    %94 = tpu.dynamic_rotate %93 by %c15_i32_69 dim 1 : vector<2x256xf32>, i32 -> vector<2x256xf32>
    %95 = arith.subf %94, %93 : vector<2x256xf32>
    %96 = arith.mulf %95, %95 : vector<2x256xf32>
    %97 = arith.addf %91, %96 : vector<2x256xf32>
    %c0_70 = arith.constant 0 : index
    %c3_71 = arith.constant 3 : index
    %c0_72 = arith.constant 0 : index
    %c0_73 = arith.constant 0 : index
    %98 = vector.load %arg2[%c0_70, %c3_71, %c0_72, %c0_73] : memref<1x4x2x256xf32, #tpu.memory_space<vmem>>, vector<1x1x2x256xf32>
    %99 = vector.shape_cast %98 : vector<1x1x2x256xf32> to vector<2x256xf32>
    %c15_i32_74 = arith.constant 15 : i32
    %100 = tpu.dynamic_rotate %99 by %c15_i32_74 dim 1 : vector<2x256xf32>, i32 -> vector<2x256xf32>
    %101 = arith.subf %100, %99 : vector<2x256xf32>
    %102 = arith.mulf %101, %101 : vector<2x256xf32>
    %103 = arith.addf %97, %102 : vector<2x256xf32>
    %c2_75 = arith.constant 2 : index
    %c0_76 = arith.constant 0 : index
    %c0_77 = arith.constant 0 : index
    %104 = vector.load %arg1[%c2_75, %c0_76, %c0_77] : memref<9x1x256xf32, #tpu.memory_space<vmem>>, vector<1x1x256xf32>
    %105 = vector.shape_cast %104 : vector<1x1x256xf32> to vector<1x256xf32>
    %cst_78 = arith.constant 0.000000e+00 : f32
    %106 = vector.broadcast %cst_78 : f32 to vector<2x256xf32>
    %107 = arith.subf %106, %103 : vector<2x256xf32>
    %cst_79 = arith.constant 2.000000e+00 : f32
    %108 = vector.broadcast %cst_79 : f32 to vector<2x256xf32>
    %109 = arith.mulf %107, %108 : vector<2x256xf32>
    %110 = math.exp %109 : vector<2x256xf32>
    %111 = vector.broadcast %105 : vector<1x256xf32> to vector<2x256xf32>
    %112 = arith.mulf %111, %110 : vector<2x256xf32>
    %c2_80 = arith.constant 2 : index
    %c0_81 = arith.constant 0 : index
    %c0_82 = arith.constant 0 : index
    %113 = vector.load %arg6[%c2_80, %c0_81, %c0_82] : memref<9x2x256xf32, #tpu.memory_space<vmem>>, vector<1x2x256xf32>
    %114 = vector.shape_cast %113 : vector<1x2x256xf32> to vector<2x256xf32>
    %115 = vector.shape_cast %112 : vector<2x256xf32> to vector<1x2x256xf32>
    tpu.vector_store %arg6[%c2_80, %c0_81, %c0_82], %115 {strides = array<i32>} : memref<9x2x256xf32, #tpu.memory_space<vmem>>, vector<1x2x256xf32>,
    %116 = arith.addf %78, %112 : vector<2x256xf32>
    %cst_83 = arith.constant 0.000000e+00 : f32
    %117 = vector.broadcast %cst_83 : f32 to vector<2x256xf32>
    %c0_84 = arith.constant 0 : index
    %c0_85 = arith.constant 0 : index
    %c0_86 = arith.constant 0 : index
    %c0_87 = arith.constant 0 : index
    %118 = vector.load %arg2[%c0_84, %c0_85, %c0_86, %c0_87] : memref<1x4x2x256xf32, #tpu.memory_space<vmem>>, vector<1x1x2x256xf32>
    %119 = vector.shape_cast %118 : vector<1x1x2x256xf32> to vector<2x256xf32>
    %c1_i32 = arith.constant 1 : i32
    %120 = tpu.dynamic_rotate %119 by %c1_i32 dim 1 : vector<2x256xf32>, i32 -> vector<2x256xf32>
    %121 = arith.subf %120, %119 : vector<2x256xf32>
    %122 = arith.mulf %121, %121 : vector<2x256xf32>
    %123 = arith.addf %117, %122 : vector<2x256xf32>
    %c0_88 = arith.constant 0 : index
    %c1_89 = arith.constant 1 : index
    %c0_90 = arith.constant 0 : index
    %c0_91 = arith.constant 0 : index
    %124 = vector.load %arg2[%c0_88, %c1_89, %c0_90, %c0_91] : memref<1x4x2x256xf32, #tpu.memory_space<vmem>>, vector<1x1x2x256xf32>
    %125 = vector.shape_cast %124 : vector<1x1x2x256xf32> to vector<2x256xf32>
    %c1_i32_92 = arith.constant 1 : i32
    %126 = tpu.dynamic_rotate %125 by %c1_i32_92 dim 1 : vector<2x256xf32>, i32 -> vector<2x256xf32>
    %127 = arith.subf %126, %125 : vector<2x256xf32>
    %128 = arith.mulf %127, %127 : vector<2x256xf32>
    %129 = arith.addf %123, %128 : vector<2x256xf32>
    %c0_93 = arith.constant 0 : index
    %c2_94 = arith.constant 2 : index
    %c0_95 = arith.constant 0 : index
    %c0_96 = arith.constant 0 : index
    %130 = vector.load %arg2[%c0_93, %c2_94, %c0_95, %c0_96] : memref<1x4x2x256xf32, #tpu.memory_space<vmem>>, vector<1x1x2x256xf32>
    %131 = vector.shape_cast %130 : vector<1x1x2x256xf32> to vector<2x256xf32>
    %c1_i32_97 = arith.constant 1 : i32
    %132 = tpu.dynamic_rotate %131 by %c1_i32_97 dim 1 : vector<2x256xf32>, i32 -> vector<2x256xf32>
    %133 = arith.subf %132, %131 : vector<2x256xf32>
    %134 = arith.mulf %133, %133 : vector<2x256xf32>
    %135 = arith.addf %129, %134 : vector<2x256xf32>
    %c0_98 = arith.constant 0 : index
    %c3_99 = arith.constant 3 : index
    %c0_100 = arith.constant 0 : index
    %c0_101 = arith.constant 0 : index
    %136 = vector.load %arg2[%c0_98, %c3_99, %c0_100, %c0_101] : memref<1x4x2x256xf32, #tpu.memory_space<vmem>>, vector<1x1x2x256xf32>
    %137 = vector.shape_cast %136 : vector<1x1x2x256xf32> to vector<2x256xf32>
    %c1_i32_102 = arith.constant 1 : i32
    %138 = tpu.dynamic_rotate %137 by %c1_i32_102 dim 1 : vector<2x256xf32>, i32 -> vector<2x256xf32>
    %139 = arith.subf %138, %137 : vector<2x256xf32>
    %140 = arith.mulf %139, %139 : vector<2x256xf32>
    %141 = arith.addf %135, %140 : vector<2x256xf32>
    %c3_103 = arith.constant 3 : index
    %c0_104 = arith.constant 0 : index
    %c0_105 = arith.constant 0 : index
    %142 = vector.load %arg1[%c3_103, %c0_104, %c0_105] : memref<9x1x256xf32, #tpu.memory_space<vmem>>, vector<1x1x256xf32>
    %143 = vector.shape_cast %142 : vector<1x1x256xf32> to vector<1x256xf32>
    %cst_106 = arith.constant 0.000000e+00 : f32
    %144 = vector.broadcast %cst_106 : f32 to vector<2x256xf32>
    %145 = arith.subf %144, %141 : vector<2x256xf32>
    %cst_107 = arith.constant 2.000000e+00 : f32
    %146 = vector.broadcast %cst_107 : f32 to vector<2x256xf32>
    %147 = arith.mulf %145, %146 : vector<2x256xf32>
    %148 = math.exp %147 : vector<2x256xf32>
    %149 = vector.broadcast %143 : vector<1x256xf32> to vector<2x256xf32>
    %150 = arith.mulf %149, %148 : vector<2x256xf32>
    %c3_108 = arith.constant 3 : index
    %c0_109 = arith.constant 0 : index
    %c0_110 = arith.constant 0 : index
    %151 = vector.load %arg6[%c3_108, %c0_109, %c0_110] : memref<9x2x256xf32, #tpu.memory_space<vmem>>, vector<1x2x256xf32>
    %152 = vector.shape_cast %151 : vector<1x2x256xf32> to vector<2x256xf32>
    %153 = vector.shape_cast %150 : vector<2x256xf32> to vector<1x2x256xf32>
    tpu.vector_store %arg6[%c3_108, %c0_109, %c0_110], %153 {strides = array<i32>} : memref<9x2x256xf32, #tpu.memory_space<vmem>>, vector<1x2x256xf32>,
    %154 = arith.addf %116, %150 : vector<2x256xf32>
    %cst_111 = arith.constant 0.000000e+00 : f32
    %155 = vector.broadcast %cst_111 : f32 to vector<2x256xf32>
    %c4 = arith.constant 4 : index
    %c0_112 = arith.constant 0 : index
    %c0_113 = arith.constant 0 : index
    %156 = vector.load %arg1[%c4, %c0_112, %c0_113] : memref<9x1x256xf32, #tpu.memory_space<vmem>>, vector<1x1x256xf32>
    %157 = vector.shape_cast %156 : vector<1x1x256xf32> to vector<1x256xf32>
    %cst_114 = arith.constant 0.000000e+00 : f32
    %158 = vector.broadcast %cst_114 : f32 to vector<2x256xf32>
    %159 = arith.subf %158, %155 : vector<2x256xf32>
    %cst_115 = arith.constant 2.000000e+00 : f32
    %160 = vector.broadcast %cst_115 : f32 to vector<2x256xf32>
    %161 = arith.mulf %159, %160 : vector<2x256xf32>
    %162 = math.exp %161 : vector<2x256xf32>
    %163 = vector.broadcast %157 : vector<1x256xf32> to vector<2x256xf32>
    %164 = arith.mulf %163, %162 : vector<2x256xf32>
    %c4_116 = arith.constant 4 : index
    %c0_117 = arith.constant 0 : index
    %c0_118 = arith.constant 0 : index
    %165 = vector.load %arg6[%c4_116, %c0_117, %c0_118] : memref<9x2x256xf32, #tpu.memory_space<vmem>>, vector<1x2x256xf32>
    %166 = vector.shape_cast %165 : vector<1x2x256xf32> to vector<2x256xf32>
    %167 = vector.shape_cast %164 : vector<2x256xf32> to vector<1x2x256xf32>
    tpu.vector_store %arg6[%c4_116, %c0_117, %c0_118], %167 {strides = array<i32>} : memref<9x2x256xf32, #tpu.memory_space<vmem>>, vector<1x2x256xf32>,
    %168 = arith.addf %154, %164 : vector<2x256xf32>
    %cst_119 = arith.constant 0.000000e+00 : f32
    %169 = vector.broadcast %cst_119 : f32 to vector<2x256xf32>
    %c0_120 = arith.constant 0 : index
    %c0_121 = arith.constant 0 : index
    %c0_122 = arith.constant 0 : index
    %c0_123 = arith.constant 0 : index
    %170 = vector.load %arg2[%c0_120, %c0_121, %c0_122, %c0_123] : memref<1x4x2x256xf32, #tpu.memory_space<vmem>>, vector<1x1x2x256xf32>
    %171 = vector.shape_cast %170 : vector<1x1x2x256xf32> to vector<2x256xf32>
    %c255_i32 = arith.constant 255 : i32
    %172 = tpu.dynamic_rotate %171 by %c255_i32 dim 1 : vector<2x256xf32>, i32 -> vector<2x256xf32>
    %173 = arith.subf %172, %171 : vector<2x256xf32>
    %174 = arith.mulf %173, %173 : vector<2x256xf32>
    %175 = arith.addf %169, %174 : vector<2x256xf32>
    %c0_124 = arith.constant 0 : index
    %c1_125 = arith.constant 1 : index
    %c0_126 = arith.constant 0 : index
    %c0_127 = arith.constant 0 : index
    %176 = vector.load %arg2[%c0_124, %c1_125, %c0_126, %c0_127] : memref<1x4x2x256xf32, #tpu.memory_space<vmem>>, vector<1x1x2x256xf32>
    %177 = vector.shape_cast %176 : vector<1x1x2x256xf32> to vector<2x256xf32>
    %c255_i32_128 = arith.constant 255 : i32
    %178 = tpu.dynamic_rotate %177 by %c255_i32_128 dim 1 : vector<2x256xf32>, i32 -> vector<2x256xf32>
    %179 = arith.subf %178, %177 : vector<2x256xf32>
    %180 = arith.mulf %179, %179 : vector<2x256xf32>
    %181 = arith.addf %175, %180 : vector<2x256xf32>
    %c0_129 = arith.constant 0 : index
    %c2_130 = arith.constant 2 : index
    %c0_131 = arith.constant 0 : index
    %c0_132 = arith.constant 0 : index
    %182 = vector.load %arg2[%c0_129, %c2_130, %c0_131, %c0_132] : memref<1x4x2x256xf32, #tpu.memory_space<vmem>>, vector<1x1x2x256xf32>
    %183 = vector.shape_cast %182 : vector<1x1x2x256xf32> to vector<2x256xf32>
    %c255_i32_133 = arith.constant 255 : i32
    %184 = tpu.dynamic_rotate %183 by %c255_i32_133 dim 1 : vector<2x256xf32>, i32 -> vector<2x256xf32>
    %185 = arith.subf %184, %183 : vector<2x256xf32>
    %186 = arith.mulf %185, %185 : vector<2x256xf32>
    %187 = arith.addf %181, %186 : vector<2x256xf32>
    %c0_134 = arith.constant 0 : index
    %c3_135 = arith.constant 3 : index
    %c0_136 = arith.constant 0 : index
    %c0_137 = arith.constant 0 : index
    %188 = vector.load %arg2[%c0_134, %c3_135, %c0_136, %c0_137] : memref<1x4x2x256xf32, #tpu.memory_space<vmem>>, vector<1x1x2x256xf32>
    %189 = vector.shape_cast %188 : vector<1x1x2x256xf32> to vector<2x256xf32>
    %c255_i32_138 = arith.constant 255 : i32
    %190 = tpu.dynamic_rotate %189 by %c255_i32_138 dim 1 : vector<2x256xf32>, i32 -> vector<2x256xf32>
    %191 = arith.subf %190, %189 : vector<2x256xf32>
    %192 = arith.mulf %191, %191 : vector<2x256xf32>
    %193 = arith.addf %187, %192 : vector<2x256xf32>
    %c5 = arith.constant 5 : index
    %c0_139 = arith.constant 0 : index
    %c0_140 = arith.constant 0 : index
    %194 = vector.load %arg1[%c5, %c0_139, %c0_140] : memref<9x1x256xf32, #tpu.memory_space<vmem>>, vector<1x1x256xf32>
    %195 = vector.shape_cast %194 : vector<1x1x256xf32> to vector<1x256xf32>
    %cst_141 = arith.constant 0.000000e+00 : f32
    %196 = vector.broadcast %cst_141 : f32 to vector<2x256xf32>
    %197 = arith.subf %196, %193 : vector<2x256xf32>
    %cst_142 = arith.constant 2.000000e+00 : f32
    %198 = vector.broadcast %cst_142 : f32 to vector<2x256xf32>
    %199 = arith.mulf %197, %198 : vector<2x256xf32>
    %200 = math.exp %199 : vector<2x256xf32>
    %201 = vector.broadcast %195 : vector<1x256xf32> to vector<2x256xf32>
    %202 = arith.mulf %201, %200 : vector<2x256xf32>
    %c5_143 = arith.constant 5 : index
    %c0_144 = arith.constant 0 : index
    %c0_145 = arith.constant 0 : index
    %203 = vector.load %arg6[%c5_143, %c0_144, %c0_145] : memref<9x2x256xf32, #tpu.memory_space<vmem>>, vector<1x2x256xf32>
    %204 = vector.shape_cast %203 : vector<1x2x256xf32> to vector<2x256xf32>
    %205 = vector.shape_cast %202 : vector<2x256xf32> to vector<1x2x256xf32>
    tpu.vector_store %arg6[%c5_143, %c0_144, %c0_145], %205 {strides = array<i32>} : memref<9x2x256xf32, #tpu.memory_space<vmem>>, vector<1x2x256xf32>,
    %206 = arith.addf %168, %202 : vector<2x256xf32>
    %cst_146 = arith.constant 0.000000e+00 : f32
    %207 = vector.broadcast %cst_146 : f32 to vector<2x256xf32>
    %c0_147 = arith.constant 0 : index
    %c0_148 = arith.constant 0 : index
    %c0_149 = arith.constant 0 : index
    %c0_150 = arith.constant 0 : index
    %208 = vector.load %arg2[%c0_147, %c0_148, %c0_149, %c0_150] : memref<1x4x2x256xf32, #tpu.memory_space<vmem>>, vector<1x1x2x256xf32>
    %209 = vector.shape_cast %208 : vector<1x1x2x256xf32> to vector<2x256xf32>
    %c241_i32 = arith.constant 241 : i32
    %210 = tpu.dynamic_rotate %209 by %c241_i32 dim 1 : vector<2x256xf32>, i32 -> vector<2x256xf32>
    %211 = arith.subf %210, %209 : vector<2x256xf32>
    %212 = arith.mulf %211, %211 : vector<2x256xf32>
    %213 = arith.addf %207, %212 : vector<2x256xf32>
    %c0_151 = arith.constant 0 : index
    %c1_152 = arith.constant 1 : index
    %c0_153 = arith.constant 0 : index
    %c0_154 = arith.constant 0 : index
    %214 = vector.load %arg2[%c0_151, %c1_152, %c0_153, %c0_154] : memref<1x4x2x256xf32, #tpu.memory_space<vmem>>, vector<1x1x2x256xf32>
    %215 = vector.shape_cast %214 : vector<1x1x2x256xf32> to vector<2x256xf32>
    %c241_i32_155 = arith.constant 241 : i32
    %216 = tpu.dynamic_rotate %215 by %c241_i32_155 dim 1 : vector<2x256xf32>, i32 -> vector<2x256xf32>
    %217 = arith.subf %216, %215 : vector<2x256xf32>
    %218 = arith.mulf %217, %217 : vector<2x256xf32>
    %219 = arith.addf %213, %218 : vector<2x256xf32>
    %c0_156 = arith.constant 0 : index
    %c2_157 = arith.constant 2 : index
    %c0_158 = arith.constant 0 : index
    %c0_159 = arith.constant 0 : index
    %220 = vector.load %arg2[%c0_156, %c2_157, %c0_158, %c0_159] : memref<1x4x2x256xf32, #tpu.memory_space<vmem>>, vector<1x1x2x256xf32>
    %221 = vector.shape_cast %220 : vector<1x1x2x256xf32> to vector<2x256xf32>
    %c241_i32_160 = arith.constant 241 : i32
    %222 = tpu.dynamic_rotate %221 by %c241_i32_160 dim 1 : vector<2x256xf32>, i32 -> vector<2x256xf32>
    %223 = arith.subf %222, %221 : vector<2x256xf32>
    %224 = arith.mulf %223, %223 : vector<2x256xf32>
    %225 = arith.addf %219, %224 : vector<2x256xf32>
    %c0_161 = arith.constant 0 : index
    %c3_162 = arith.constant 3 : index
    %c0_163 = arith.constant 0 : index
    %c0_164 = arith.constant 0 : index
    %226 = vector.load %arg2[%c0_161, %c3_162, %c0_163, %c0_164] : memref<1x4x2x256xf32, #tpu.memory_space<vmem>>, vector<1x1x2x256xf32>
    %227 = vector.shape_cast %226 : vector<1x1x2x256xf32> to vector<2x256xf32>
    %c241_i32_165 = arith.constant 241 : i32
    %228 = tpu.dynamic_rotate %227 by %c241_i32_165 dim 1 : vector<2x256xf32>, i32 -> vector<2x256xf32>
    %229 = arith.subf %228, %227 : vector<2x256xf32>
    %230 = arith.mulf %229, %229 : vector<2x256xf32>
    %231 = arith.addf %225, %230 : vector<2x256xf32>
    %c6 = arith.constant 6 : index
    %c0_166 = arith.constant 0 : index
    %c0_167 = arith.constant 0 : index
    %232 = vector.load %arg1[%c6, %c0_166, %c0_167] : memref<9x1x256xf32, #tpu.memory_space<vmem>>, vector<1x1x256xf32>
    %233 = vector.shape_cast %232 : vector<1x1x256xf32> to vector<1x256xf32>
    %cst_168 = arith.constant 0.000000e+00 : f32
    %234 = vector.broadcast %cst_168 : f32 to vector<2x256xf32>
    %235 = arith.subf %234, %231 : vector<2x256xf32>
    %cst_169 = arith.constant 2.000000e+00 : f32
    %236 = vector.broadcast %cst_169 : f32 to vector<2x256xf32>
    %237 = arith.mulf %235, %236 : vector<2x256xf32>
    %238 = math.exp %237 : vector<2x256xf32>
    %239 = vector.broadcast %233 : vector<1x256xf32> to vector<2x256xf32>
    %240 = arith.mulf %239, %238 : vector<2x256xf32>
    %c6_170 = arith.constant 6 : index
    %c0_171 = arith.constant 0 : index
    %c0_172 = arith.constant 0 : index
    %241 = vector.load %arg6[%c6_170, %c0_171, %c0_172] : memref<9x2x256xf32, #tpu.memory_space<vmem>>, vector<1x2x256xf32>
    %242 = vector.shape_cast %241 : vector<1x2x256xf32> to vector<2x256xf32>
    %243 = vector.shape_cast %240 : vector<2x256xf32> to vector<1x2x256xf32>
    tpu.vector_store %arg6[%c6_170, %c0_171, %c0_172], %243 {strides = array<i32>} : memref<9x2x256xf32, #tpu.memory_space<vmem>>, vector<1x2x256xf32>,
    %244 = arith.addf %206, %240 : vector<2x256xf32>
    %cst_173 = arith.constant 0.000000e+00 : f32
    %245 = vector.broadcast %cst_173 : f32 to vector<2x256xf32>
    %c0_174 = arith.constant 0 : index
    %c0_175 = arith.constant 0 : index
    %c0_176 = arith.constant 0 : index
    %c0_177 = arith.constant 0 : index
    %246 = vector.load %arg2[%c0_174, %c0_175, %c0_176, %c0_177] : memref<1x4x2x256xf32, #tpu.memory_space<vmem>>, vector<1x1x2x256xf32>
    %247 = vector.shape_cast %246 : vector<1x1x2x256xf32> to vector<2x256xf32>
    %c240_i32 = arith.constant 240 : i32
    %248 = tpu.dynamic_rotate %247 by %c240_i32 dim 1 : vector<2x256xf32>, i32 -> vector<2x256xf32>
    %249 = arith.subf %248, %247 : vector<2x256xf32>
    %250 = arith.mulf %249, %249 : vector<2x256xf32>
    %251 = arith.addf %245, %250 : vector<2x256xf32>
    %c0_178 = arith.constant 0 : index
    %c1_179 = arith.constant 1 : index
    %c0_180 = arith.constant 0 : index
    %c0_181 = arith.constant 0 : index
    %252 = vector.load %arg2[%c0_178, %c1_179, %c0_180, %c0_181] : memref<1x4x2x256xf32, #tpu.memory_space<vmem>>, vector<1x1x2x256xf32>
    %253 = vector.shape_cast %252 : vector<1x1x2x256xf32> to vector<2x256xf32>
    %c240_i32_182 = arith.constant 240 : i32
    %254 = tpu.dynamic_rotate %253 by %c240_i32_182 dim 1 : vector<2x256xf32>, i32 -> vector<2x256xf32>
    %255 = arith.subf %254, %253 : vector<2x256xf32>
    %256 = arith.mulf %255, %255 : vector<2x256xf32>
    %257 = arith.addf %251, %256 : vector<2x256xf32>
    %c0_183 = arith.constant 0 : index
    %c2_184 = arith.constant 2 : index
    %c0_185 = arith.constant 0 : index
    %c0_186 = arith.constant 0 : index
    %258 = vector.load %arg2[%c0_183, %c2_184, %c0_185, %c0_186] : memref<1x4x2x256xf32, #tpu.memory_space<vmem>>, vector<1x1x2x256xf32>
    %259 = vector.shape_cast %258 : vector<1x1x2x256xf32> to vector<2x256xf32>
    %c240_i32_187 = arith.constant 240 : i32
    %260 = tpu.dynamic_rotate %259 by %c240_i32_187 dim 1 : vector<2x256xf32>, i32 -> vector<2x256xf32>
    %261 = arith.subf %260, %259 : vector<2x256xf32>
    %262 = arith.mulf %261, %261 : vector<2x256xf32>
    %263 = arith.addf %257, %262 : vector<2x256xf32>
    %c0_188 = arith.constant 0 : index
    %c3_189 = arith.constant 3 : index
    %c0_190 = arith.constant 0 : index
    %c0_191 = arith.constant 0 : index
    %264 = vector.load %arg2[%c0_188, %c3_189, %c0_190, %c0_191] : memref<1x4x2x256xf32, #tpu.memory_space<vmem>>, vector<1x1x2x256xf32>
    %265 = vector.shape_cast %264 : vector<1x1x2x256xf32> to vector<2x256xf32>
    %c240_i32_192 = arith.constant 240 : i32
    %266 = tpu.dynamic_rotate %265 by %c240_i32_192 dim 1 : vector<2x256xf32>, i32 -> vector<2x256xf32>
    %267 = arith.subf %266, %265 : vector<2x256xf32>
    %268 = arith.mulf %267, %267 : vector<2x256xf32>
    %269 = arith.addf %263, %268 : vector<2x256xf32>
    %c7 = arith.constant 7 : index
    %c0_193 = arith.constant 0 : index
    %c0_194 = arith.constant 0 : index
    %270 = vector.load %arg1[%c7, %c0_193, %c0_194] : memref<9x1x256xf32, #tpu.memory_space<vmem>>, vector<1x1x256xf32>
    %271 = vector.shape_cast %270 : vector<1x1x256xf32> to vector<1x256xf32>
    %cst_195 = arith.constant 0.000000e+00 : f32
    %272 = vector.broadcast %cst_195 : f32 to vector<2x256xf32>
    %273 = arith.subf %272, %269 : vector<2x256xf32>
    %cst_196 = arith.constant 2.000000e+00 : f32
    %274 = vector.broadcast %cst_196 : f32 to vector<2x256xf32>
    %275 = arith.mulf %273, %274 : vector<2x256xf32>
    %276 = math.exp %275 : vector<2x256xf32>
    %277 = vector.broadcast %271 : vector<1x256xf32> to vector<2x256xf32>
    %278 = arith.mulf %277, %276 : vector<2x256xf32>
    %c7_197 = arith.constant 7 : index
    %c0_198 = arith.constant 0 : index
    %c0_199 = arith.constant 0 : index
    %279 = vector.load %arg6[%c7_197, %c0_198, %c0_199] : memref<9x2x256xf32, #tpu.memory_space<vmem>>, vector<1x2x256xf32>
    %280 = vector.shape_cast %279 : vector<1x2x256xf32> to vector<2x256xf32>
    %281 = vector.shape_cast %278 : vector<2x256xf32> to vector<1x2x256xf32>
    tpu.vector_store %arg6[%c7_197, %c0_198, %c0_199], %281 {strides = array<i32>} : memref<9x2x256xf32, #tpu.memory_space<vmem>>, vector<1x2x256xf32>,
    %282 = arith.addf %244, %278 : vector<2x256xf32>
    %cst_200 = arith.constant 0.000000e+00 : f32
    %283 = vector.broadcast %cst_200 : f32 to vector<2x256xf32>
    %c0_201 = arith.constant 0 : index
    %c0_202 = arith.constant 0 : index
    %c0_203 = arith.constant 0 : index
    %c0_204 = arith.constant 0 : index
    %284 = vector.load %arg2[%c0_201, %c0_202, %c0_203, %c0_204] : memref<1x4x2x256xf32, #tpu.memory_space<vmem>>, vector<1x1x2x256xf32>
    %285 = vector.shape_cast %284 : vector<1x1x2x256xf32> to vector<2x256xf32>
    %c239_i32 = arith.constant 239 : i32
    %286 = tpu.dynamic_rotate %285 by %c239_i32 dim 1 : vector<2x256xf32>, i32 -> vector<2x256xf32>
    %287 = arith.subf %286, %285 : vector<2x256xf32>
    %288 = arith.mulf %287, %287 : vector<2x256xf32>
    %289 = arith.addf %283, %288 : vector<2x256xf32>
    %c0_205 = arith.constant 0 : index
    %c1_206 = arith.constant 1 : index
    %c0_207 = arith.constant 0 : index
    %c0_208 = arith.constant 0 : index
    %290 = vector.load %arg2[%c0_205, %c1_206, %c0_207, %c0_208] : memref<1x4x2x256xf32, #tpu.memory_space<vmem>>, vector<1x1x2x256xf32>
    %291 = vector.shape_cast %290 : vector<1x1x2x256xf32> to vector<2x256xf32>
    %c239_i32_209 = arith.constant 239 : i32
    %292 = tpu.dynamic_rotate %291 by %c239_i32_209 dim 1 : vector<2x256xf32>, i32 -> vector<2x256xf32>
    %293 = arith.subf %292, %291 : vector<2x256xf32>
    %294 = arith.mulf %293, %293 : vector<2x256xf32>
    %295 = arith.addf %289, %294 : vector<2x256xf32>
    %c0_210 = arith.constant 0 : index
    %c2_211 = arith.constant 2 : index
    %c0_212 = arith.constant 0 : index
    %c0_213 = arith.constant 0 : index
    %296 = vector.load %arg2[%c0_210, %c2_211, %c0_212, %c0_213] : memref<1x4x2x256xf32, #tpu.memory_space<vmem>>, vector<1x1x2x256xf32>
    %297 = vector.shape_cast %296 : vector<1x1x2x256xf32> to vector<2x256xf32>
    %c239_i32_214 = arith.constant 239 : i32
    %298 = tpu.dynamic_rotate %297 by %c239_i32_214 dim 1 : vector<2x256xf32>, i32 -> vector<2x256xf32>
    %299 = arith.subf %298, %297 : vector<2x256xf32>
    %300 = arith.mulf %299, %299 : vector<2x256xf32>
    %301 = arith.addf %295, %300 : vector<2x256xf32>
    %c0_215 = arith.constant 0 : index
    %c3_216 = arith.constant 3 : index
    %c0_217 = arith.constant 0 : index
    %c0_218 = arith.constant 0 : index
    %302 = vector.load %arg2[%c0_215, %c3_216, %c0_217, %c0_218] : memref<1x4x2x256xf32, #tpu.memory_space<vmem>>, vector<1x1x2x256xf32>
    %303 = vector.shape_cast %302 : vector<1x1x2x256xf32> to vector<2x256xf32>
    %c239_i32_219 = arith.constant 239 : i32
    %304 = tpu.dynamic_rotate %303 by %c239_i32_219 dim 1 : vector<2x256xf32>, i32 -> vector<2x256xf32>
    %305 = arith.subf %304, %303 : vector<2x256xf32>
    %306 = arith.mulf %305, %305 : vector<2x256xf32>
    %307 = arith.addf %301, %306 : vector<2x256xf32>
    %c8 = arith.constant 8 : index
    %c0_220 = arith.constant 0 : index
    %c0_221 = arith.constant 0 : index
    %308 = vector.load %arg1[%c8, %c0_220, %c0_221] : memref<9x1x256xf32, #tpu.memory_space<vmem>>, vector<1x1x256xf32>
    %309 = vector.shape_cast %308 : vector<1x1x256xf32> to vector<1x256xf32>
    %cst_222 = arith.constant 0.000000e+00 : f32
    %310 = vector.broadcast %cst_222 : f32 to vector<2x256xf32>
    %311 = arith.subf %310, %307 : vector<2x256xf32>
    %cst_223 = arith.constant 2.000000e+00 : f32
    %312 = vector.broadcast %cst_223 : f32 to vector<2x256xf32>
    %313 = arith.mulf %311, %312 : vector<2x256xf32>
    %314 = math.exp %313 : vector<2x256xf32>
    %315 = vector.broadcast %309 : vector<1x256xf32> to vector<2x256xf32>
    %316 = arith.mulf %315, %314 : vector<2x256xf32>
    %c8_224 = arith.constant 8 : index
    %c0_225 = arith.constant 0 : index
    %c0_226 = arith.constant 0 : index
    %317 = vector.load %arg6[%c8_224, %c0_225, %c0_226] : memref<9x2x256xf32, #tpu.memory_space<vmem>>, vector<1x2x256xf32>
    %318 = vector.shape_cast %317 : vector<1x2x256xf32> to vector<2x256xf32>
    %319 = vector.shape_cast %316 : vector<2x256xf32> to vector<1x2x256xf32>
    tpu.vector_store %arg6[%c8_224, %c0_225, %c0_226], %319 {strides = array<i32>} : memref<9x2x256xf32, #tpu.memory_space<vmem>>, vector<1x2x256xf32>,
    %320 = arith.addf %282, %316 : vector<2x256xf32>
    %cst_227 = arith.constant 0.000000e+00 : f32
    %321 = vector.broadcast %cst_227 : f32 to vector<2x256xf32>
    %322 = arith.cmpf ogt, %1, %321 : vector<2x256xf32>
    %cst_228 = arith.constant 5.000000e-01 : f32
    %323 = vector.broadcast %cst_228 : f32 to vector<2x256xf32>
    %324 = arith.mulf %323, %320 : vector<2x256xf32>
    %cst_229 = arith.constant 1.000000e-30 : f32
    %325 = vector.broadcast %cst_229 : f32 to vector<2x256xf32>
    %326 = arith.maximumf %1, %325 : vector<2x256xf32>
    %327 = math.log %326 : vector<2x256xf32>
    %cst_230 = arith.constant 2.49164438 : f32
    %328 = vector.broadcast %cst_230 : f32 to vector<2x256xf32>
    %329 = arith.mulf %327, %328 : vector<2x256xf32>
    %330 = arith.subf %324, %329 : vector<2x256xf32>
    %cst_231 = arith.constant 3.000000e+38 : f32
    %331 = vector.broadcast %cst_231 : f32 to vector<2x256xf32>
    %332 = arith.select %322, %330, %331 : vector<2x256xi1>, vector<2x256xf32>
    %c0_232 = arith.constant 0 : index
    %c0_233 = arith.constant 0 : index
    %333 = vector.load %arg7[%c0_232, %c0_233] : memref<2x256xf32, #tpu.memory_space<vmem>>, vector<2x256xf32>
    tpu.vector_store %arg7[%c0_232, %c0_233], %332 {strides = array<i32>} : memref<2x256xf32, #tpu.memory_space<vmem>>, vector<2x256xf32>,
    %c0_234 = arith.constant 0 : index
    %c0_235 = arith.constant 0 : index
    %c0_236 = arith.constant 0 : index
    %334 = vector.load %arg3[%c0_234, %c0_235, %c0_236] : memref<1x2x256xf32, #tpu.memory_space<vmem>>, vector<1x2x256xf32>
    %335 = vector.shape_cast %334 : vector<1x2x256xf32> to vector<2x256xf32>
    %336 = arith.mulf %335, %1 : vector<2x256xf32>
    %cst_237 = arith.constant 5.000000e-01 : f32
    %337 = vector.broadcast %cst_237 : f32 to vector<2x256xf32>
    %338 = arith.cmpf ogt, %336, %337 : vector<2x256xf32>
    %cst_238 = arith.constant 1.000000e+00 : f32
    %cst_239 = arith.constant 0.000000e+00 : f32
    %339 = vector.broadcast %cst_238 : f32 to vector<2x256xf32>
    %340 = vector.broadcast %cst_239 : f32 to vector<2x256xf32>
    %341 = arith.select %338, %339, %340 : vector<2x256xi1>, vector<2x256xf32>
    %c0_i32 = arith.constant 0 : i32
    %c20_i32 = arith.constant 20 : i32
    %342 = arith.addi %c0_i32, %c20_i32 : i32
    %c1_i32_240 = arith.constant 1 : i32
    %343 = scf.for %arg8 = %c0_i32 to %342 step %c1_i32_240 iter_args(%arg9 = %341) -> (vector<2x256xf32>)  : i32 {
      %cst_244 = arith.constant 0.000000e+00 : f32
      %347 = vector.broadcast %cst_244 : f32 to vector<2x256xf32>
      %c17_i32_245 = arith.constant 17 : i32
      %348 = tpu.dynamic_rotate %arg9 by %c17_i32_245 dim 1 : vector<2x256xf32>, i32 -> vector<2x256xf32>
      %c0_246 = arith.constant 0 : index
      %c0_247 = arith.constant 0 : index
      %c0_248 = arith.constant 0 : index
      %349 = vector.load %arg6[%c0_246, %c0_247, %c0_248] : memref<9x2x256xf32, #tpu.memory_space<vmem>>, vector<1x2x256xf32>
      %350 = vector.shape_cast %349 : vector<1x2x256xf32> to vector<2x256xf32>
      %351 = arith.mulf %350, %348 : vector<2x256xf32>
      %352 = arith.addf %347, %351 : vector<2x256xf32>
      %c16_i32_249 = arith.constant 16 : i32
      %353 = tpu.dynamic_rotate %arg9 by %c16_i32_249 dim 1 : vector<2x256xf32>, i32 -> vector<2x256xf32>
      %c1_250 = arith.constant 1 : index
      %c0_251 = arith.constant 0 : index
      %c0_252 = arith.constant 0 : index
      %354 = vector.load %arg6[%c1_250, %c0_251, %c0_252] : memref<9x2x256xf32, #tpu.memory_space<vmem>>, vector<1x2x256xf32>
      %355 = vector.shape_cast %354 : vector<1x2x256xf32> to vector<2x256xf32>
      %356 = arith.mulf %355, %353 : vector<2x256xf32>
      %357 = arith.addf %352, %356 : vector<2x256xf32>
      %c15_i32_253 = arith.constant 15 : i32
      %358 = tpu.dynamic_rotate %arg9 by %c15_i32_253 dim 1 : vector<2x256xf32>, i32 -> vector<2x256xf32>
      %c2_254 = arith.constant 2 : index
      %c0_255 = arith.constant 0 : index
      %c0_256 = arith.constant 0 : index
      %359 = vector.load %arg6[%c2_254, %c0_255, %c0_256] : memref<9x2x256xf32, #tpu.memory_space<vmem>>, vector<1x2x256xf32>
      %360 = vector.shape_cast %359 : vector<1x2x256xf32> to vector<2x256xf32>
      %361 = arith.mulf %360, %358 : vector<2x256xf32>
      %362 = arith.addf %357, %361 : vector<2x256xf32>
      %c1_i32_257 = arith.constant 1 : i32
      %363 = tpu.dynamic_rotate %arg9 by %c1_i32_257 dim 1 : vector<2x256xf32>, i32 -> vector<2x256xf32>
      %c3_258 = arith.constant 3 : index
      %c0_259 = arith.constant 0 : index
      %c0_260 = arith.constant 0 : index
      %364 = vector.load %arg6[%c3_258, %c0_259, %c0_260] : memref<9x2x256xf32, #tpu.memory_space<vmem>>, vector<1x2x256xf32>
      %365 = vector.shape_cast %364 : vector<1x2x256xf32> to vector<2x256xf32>
      %366 = arith.mulf %365, %363 : vector<2x256xf32>
      %367 = arith.addf %362, %366 : vector<2x256xf32>
      %c4_261 = arith.constant 4 : index
      %c0_262 = arith.constant 0 : index
      %c0_263 = arith.constant 0 : index
      %368 = vector.load %arg6[%c4_261, %c0_262, %c0_263] : memref<9x2x256xf32, #tpu.memory_space<vmem>>, vector<1x2x256xf32>
      %369 = vector.shape_cast %368 : vector<1x2x256xf32> to vector<2x256xf32>
      %370 = arith.mulf %369, %arg9 : vector<2x256xf32>
      %371 = arith.addf %367, %370 : vector<2x256xf32>
      %c255_i32_264 = arith.constant 255 : i32
      %372 = tpu.dynamic_rotate %arg9 by %c255_i32_264 dim 1 : vector<2x256xf32>, i32 -> vector<2x256xf32>
      %c5_265 = arith.constant 5 : index
      %c0_266 = arith.constant 0 : index
      %c0_267 = arith.constant 0 : index
      %373 = vector.load %arg6[%c5_265, %c0_266, %c0_267] : memref<9x2x256xf32, #tpu.memory_space<vmem>>, vector<1x2x256xf32>
      %374 = vector.shape_cast %373 : vector<1x2x256xf32> to vector<2x256xf32>
      %375 = arith.mulf %374, %372 : vector<2x256xf32>
      %376 = arith.addf %371, %375 : vector<2x256xf32>
      %c241_i32_268 = arith.constant 241 : i32
      %377 = tpu.dynamic_rotate %arg9 by %c241_i32_268 dim 1 : vector<2x256xf32>, i32 -> vector<2x256xf32>
      %c6_269 = arith.constant 6 : index
      %c0_270 = arith.constant 0 : index
      %c0_271 = arith.constant 0 : index
      %378 = vector.load %arg6[%c6_269, %c0_270, %c0_271] : memref<9x2x256xf32, #tpu.memory_space<vmem>>, vector<1x2x256xf32>
      %379 = vector.shape_cast %378 : vector<1x2x256xf32> to vector<2x256xf32>
      %380 = arith.mulf %379, %377 : vector<2x256xf32>
      %381 = arith.addf %376, %380 : vector<2x256xf32>
      %c240_i32_272 = arith.constant 240 : i32
      %382 = tpu.dynamic_rotate %arg9 by %c240_i32_272 dim 1 : vector<2x256xf32>, i32 -> vector<2x256xf32>
      %c7_273 = arith.constant 7 : index
      %c0_274 = arith.constant 0 : index
      %c0_275 = arith.constant 0 : index
      %383 = vector.load %arg6[%c7_273, %c0_274, %c0_275] : memref<9x2x256xf32, #tpu.memory_space<vmem>>, vector<1x2x256xf32>
      %384 = vector.shape_cast %383 : vector<1x2x256xf32> to vector<2x256xf32>
      %385 = arith.mulf %384, %382 : vector<2x256xf32>
      %386 = arith.addf %381, %385 : vector<2x256xf32>
      %c239_i32_276 = arith.constant 239 : i32
      %387 = tpu.dynamic_rotate %arg9 by %c239_i32_276 dim 1 : vector<2x256xf32>, i32 -> vector<2x256xf32>
      %c8_277 = arith.constant 8 : index
      %c0_278 = arith.constant 0 : index
      %c0_279 = arith.constant 0 : index
      %388 = vector.load %arg6[%c8_277, %c0_278, %c0_279] : memref<9x2x256xf32, #tpu.memory_space<vmem>>, vector<1x2x256xf32>
      %389 = vector.shape_cast %388 : vector<1x2x256xf32> to vector<2x256xf32>
      %390 = arith.mulf %389, %387 : vector<2x256xf32>
      %391 = arith.addf %386, %390 : vector<2x256xf32>
      %c0_280 = arith.constant 0 : index
      %c0_281 = arith.constant 0 : index
      %392 = vector.load %arg7[%c0_280, %c0_281] : memref<2x256xf32, #tpu.memory_space<vmem>>, vector<2x256xf32>
      %393 = arith.cmpf ogt, %391, %392 : vector<2x256xf32>
      %cst_282 = arith.constant 1.000000e+00 : f32
      %cst_283 = arith.constant 0.000000e+00 : f32
      %394 = vector.broadcast %cst_282 : f32 to vector<2x256xf32>
      %395 = vector.broadcast %cst_283 : f32 to vector<2x256xf32>
      %396 = arith.select %393, %394, %395 : vector<2x256xi1>, vector<2x256xf32>
      scf.yield %396 : vector<2x256xf32>
    }
    %c0_241 = arith.constant 0 : index
    %c0_242 = arith.constant 0 : index
    %c0_243 = arith.constant 0 : index
    %344 = vector.load %arg5[%c0_241, %c0_242, %c0_243] : memref<1x2x256xf32, #tpu.memory_space<vmem>>, vector<1x2x256xf32>
    %345 = vector.shape_cast %344 : vector<1x2x256xf32> to vector<2x256xf32>
    %346 = vector.shape_cast %343 : vector<2x256xf32> to vector<1x2x256xf32>
    tpu.vector_store %arg5[%c0_241, %c0_242, %c0_243], %346 {strides = array<i32>} : memref<1x2x256xf32, #tpu.memory_space<vmem>>, vector<1x2x256xf32>,
    return
  }
  func.func @transform_0(%arg0: i32) -> (i32, i32, i32) {
    %c0_i32 = arith.constant 0 : i32
    %c0_i32_0 = arith.constant 0 : i32
    %c0_i32_1 = arith.constant 0 : i32
    %c0_i32_2 = arith.constant 0 : i32
    return %c0_i32, %c0_i32_0, %c0_i32_1 : i32, i32, i32
  }
  func.func @transform_1(%arg0: i32) -> (i32, i32, i32, i32) {
    %c0_i32 = arith.constant 0 : i32
    %c0_i32_0 = arith.constant 0 : i32
    %c0_i32_1 = arith.constant 0 : i32
    %c0_i32_2 = arith.constant 0 : i32
    return %arg0, %c0_i32, %c0_i32_0, %c0_i32_1 : i32, i32, i32, i32
  }
  func.func @transform_2(%arg0: i32) -> (i32, i32, i32) {
    %c0_i32 = arith.constant 0 : i32
    %c0_i32_0 = arith.constant 0 : i32
    %c0_i32_1 = arith.constant 0 : i32
    return %arg0, %c0_i32, %c0_i32_0 : i32, i32, i32
  }
  func.func @transform_3(%arg0: i32) -> (i32, i32, i32) {
    %c0_i32 = arith.constant 0 : i32
    %c0_i32_0 = arith.constant 0 : i32
    %c0_i32_1 = arith.constant 0 : i32
    return %arg0, %c0_i32, %c0_i32_0 : i32, i32, i32
  }
  func.func @transform_4(%arg0: i32) -> (i32, i32, i32) {
    %c0_i32 = arith.constant 0 : i32
    %c0_i32_0 = arith.constant 0 : i32
    %c0_i32_1 = arith.constant 0 : i32
    return %arg0, %c0_i32, %c0_i32_0 : i32, i32, i32
  }
}

</mosaic_0001>

<llo_original>
// kernel: mean_field_forward.1
$region0: #{mean_field_forward.1}
  #allocation0 [shape = 'u32[]', space=smem, size = 0x4, offset = 0x4, fixed_abs, tag = 'smem constant byte address 0x4 - core index']
  #allocation1 [shape = 'u32[144,128]{1,0:T(1,128)}', space=vmem, size = 0x12000, scoped, tag = 'internal scratch']
  #allocation2 [shape = 'f32[9,2,256]{2,1,0:T(2,128)}', space=vmem, size = 0x4800, scoped, tag = 'scratch operand']
  #allocation3 [shape = 'f32[2,256]{1,0:T(2,128)}', space=vmem, size = 0x800, scoped, tag = 'scratch operand']
  %s0 = inlined_call_operand.vmem [shape: f32[9,1,256], index: 0, kind: input, shape index: {}]
  %s1 = inlined_call_operand.vmem [shape: f32[1,4,2,256], index: 1, kind: input, shape index: {}]
  %s2 = inlined_call_operand.vmem [shape: f32[1,2,256], index: 2, kind: input, shape index: {}]
  %s3 = inlined_call_operand.vmem [shape: f32[1,2,256], index: 3, kind: input, shape index: {}]
  %s4 = inlined_call_operand.vmem [shape: f32[1,2,256], index: 4, kind: output, shape index: {}]
  %s5 = sld [smem:[#allocation0]]
  $region33: #{mean_field_forward.1} parent=0
    _
  %s7 = ssub.s32 1, %s5
  %s8 = scalar_select 0, %s7, %s5
  // Predicated region
  $region2: #{mean_field_forward.1} parent=0 // pred_check
    _
  $region3: #{mean_field_forward.1} parent=0 // pred_check_branch
    %10 = sbr.rel (0) target = $region5
  $region4: #{mean_field_forward.1} parent=0 // pred_region
    _
  $region5: #{mean_field_forward.1} parent=0 // pred_fallthru
    _
  // Predicated region
  $region6: #{mean_field_forward.1} parent=0 // pred_check
    _
  $region7: #{mean_field_forward.1} parent=0 // pred_check_branch
    %12 = sbr.rel (0) target = $region9
  $region8: #{mean_field_forward.1} parent=0 // pred_region
    _
  $region9: #{mean_field_forward.1} parent=0 // pred_fallthru
    _
  // Predicated region
  $region10: #{mean_field_forward.1} parent=0 // pred_check
    _
  $region11: #{mean_field_forward.1} parent=0 // pred_check_branch
    %14 = sbr.rel (0) target = $region13
  $region12: #{mean_field_forward.1} parent=0 // pred_region
    _
  $region13: #{mean_field_forward.1} parent=0 // pred_fallthru
    _
  // Predicated region
  $region14: #{mean_field_forward.1} parent=0 // pred_check
    _
  $region15: #{mean_field_forward.1} parent=0 // pred_check_branch
    %16 = sbr.rel (0) target = $region17
  $region16: #{mean_field_forward.1} parent=0 // pred_region
    _
  $region17: #{mean_field_forward.1} parent=0 // pred_fallthru
    _
  %v17 = vld [vmem:[%s3] sm:$0xf]
  %v18 = vld [vmem:[%s1] sm:$0xf]
  %v21 = vunpack.c.l.s4 1983009808
  %v22 = vunpack.c.0.s8 %v21
  %v23 = vlaneseq
  %v24 = vshrl.u32 %v23, 7
  %v25 = vsub.s32 %v22, %v24
  %v26 = vrot.slane %v18, %v25
  %v27 = vcombine.high %v26, %v26
  %30 = vrot.lane.b32.xlu0 %v26, 17
  %v31 = vpop.permute.xlu0 %30
  %32 = vrot.lane.b32.xlu0 %v27, 17
  %v33 = vpop.permute.xlu0 %32
  %v34 = vlaneseq
  %v35 = vand.u32 %v34, 127
  %vm36 = vcmp.lt.s32.totalorder %v35, 17
  %v37 = vsel %vm36, %v31, %v33
  %v38 = vsel %vm36, %v33, %v31
  %v39 = vsub.f32 %v38, %v26
  %v40 = vsub.f32 %v37, %v27
  %v41 = vmul.f32 %v39, %v39
  %v42 = vmul.f32 %v40, %v40
  %v43 = vadd.f32 %v41, 0.0
  %v44 = vadd.f32 %v42, 0.0
  %s45 = scalar_lea.vmem %s1, 4
  %v46 = vld [vmem:[%s45] sm:$0xf]
  %v49 = vunpack.c.l.s4 1983009808
  %v50 = vunpack.c.0.s8 %v49
  %v51 = vlaneseq
  %v52 = vshrl.u32 %v51, 7
  %v53 = vsub.s32 %v50, %v52
  %v54 = vrot.slane %v46, %v53
  %v55 = vcombine.high %v54, %v54
  %58 = vrot.lane.b32.xlu0 %v54, 17
  %v59 = vpop.permute.xlu0 %58
  %60 = vrot.lane.b32.xlu0 %v55, 17
  %v61 = vpop.permute.xlu0 %60
  %v62 = vsel %vm36, %v59, %v61
  %v63 = vsel %vm36, %v61, %v59
  %v64 = vsub.f32 %v63, %v54
  %v65 = vsub.f32 %v62, %v55
  %v66 = vmul.f32 %v64, %v64
  %v67 = vmul.f32 %v65, %v65
  %v68 = vadd.f32 %v43, %v66
  %v69 = vadd.f32 %v44, %v67
  %s70 = scalar_lea.vmem %s1, 8
  %v71 = vld [vmem:[%s70] sm:$0xf]
  %v74 = vunpack.c.l.s4 1983009808
  %v75 = vunpack.c.0.s8 %v74
  %v76 = vlaneseq
  %v77 = vshrl.u32 %v76, 7
  %v78 = vsub.s32 %v75, %v77
  %v79 = vrot.slane %v71, %v78
  %v80 = vcombine.high %v79, %v79
  %83 = vrot.lane.b32.xlu0 %v79, 17
  %v84 = vpop.permute.xlu0 %83
  %85 = vrot.lane.b32.xlu0 %v80, 17
  %v86 = vpop.permute.xlu0 %85
  %v87 = vsel %vm36, %v84, %v86
  %v88 = vsel %vm36, %v86, %v84
  %v89 = vsub.f32 %v88, %v79
  %v90 = vsub.f32 %v87, %v80
  %v91 = vmul.f32 %v89, %v89
  %v92 = vmul.f32 %v90, %v90
  %v93 = vadd.f32 %v68, %v91
  %v94 = vadd.f32 %v69, %v92
  %s95 = scalar_lea.vmem %s1, 12
  %v96 = vld [vmem:[%s95] sm:$0xf]
  %v99 = vunpack.c.l.s4 1983009808
  %v100 = vunpack.c.0.s8 %v99
  %v101 = vlaneseq
  %v102 = vshrl.u32 %v101, 7
  %v103 = vsub.s32 %v100, %v102
  %v104 = vrot.slane %v96, %v103
  %v105 = vcombine.high %v104, %v104
  %108 = vrot.lane.b32.xlu0 %v104, 17
  %v109 = vpop.permute.xlu0 %108
  %110 = vrot.lane.b32.xlu0 %v105, 17
  %v111 = vpop.permute.xlu0 %110
  %v112 = vsel %vm36, %v109, %v111
  %v113 = vsel %vm36, %v111, %v109
  %v114 = vsub.f32 %v113, %v104
  %v115 = vsub.f32 %v112, %v105
  %v116 = vmul.f32 %v114, %v114
  %v117 = vmul.f32 %v115, %v115
  %v118 = vadd.f32 %v93, %v116
  %v119 = vadd.f32 %v94, %v117
  %v120 = vld [vmem:[%s0] sm:$0x3]
  %v121 = vsub.f32 0.0, %v118
  %v122 = vsub.f32 0.0, %v119
  %v123 = vmul.f32 %v121, 2.0
  %v124 = vmul.f32 %v122, 2.0
  %v125 = vmul.f32 %v123, 1.442695
  %v126 = vpow.pop %v125
  %v127 = vmul.f32 %v124, 1.442695
  %v128 = vpow.pop %v127
  %v130 = vlaneseq
  %v131 = vshrl.u32 %v130, 7
  %v132 = vsub.s32 0, %v131
  %v133 = vrot.slane %v120, %v132
  %v134 = vlaneseq
  %v135 = vshrl.u32 %v134, 7
  %v136 = vsub.s32 1, %v135
  %v137 = vrot.slane %v120, %v136
  %v140 = vmul.f32 %v133, %v126
  %v141 = vmul.f32 %v137, %v128
  %v144 = vcombine.low %v140, %v141
  %v146 = vunpack.c.l.s4 1983009808
  %v147 = vunpack.c.0.s8 %v146
  %v148 = vlaneseq
  %v149 = vshrl.u32 %v148, 7
  %v150 = vsub.s32 %v147, %v149
  %v151 = vrot.slane %v144, %v150
  %153 = vst [vmem:[#allocation2] sm:$0xf] %v151
  %v154 = vadd.f32 %v140, 0.0
  %v155 = vadd.f32 %v141, 0.0
  %v156 = vld [vmem:[%s1] sm:$0xf]
  %v159 = vunpack.c.l.s4 1983009808
  %v160 = vunpack.c.0.s8 %v159
  %v161 = vlaneseq
  %v162 = vshrl.u32 %v161, 7
  %v163 = vsub.s32 %v160, %v162
  %v164 = vrot.slane %v156, %v163
  %v165 = vcombine.high %v164, %v164
  %168 = vrot.lane.b32.xlu0 %v164, 16
  %v169 = vpop.permute.xlu0 %168
  %170 = vrot.lane.b32.xlu0 %v165, 16
  %v171 = vpop.permute.xlu0 %170
  %vm172 = vcmp.lt.s32.totalorder %v35, 16
  %v173 = vsel %vm172, %v169, %v171
  %v174 = vsel %vm172, %v171, %v169
  %v175 = vsub.f32 %v174, %v164
  %v176 = vsub.f32 %v173, %v165
  %v177 = vmul.f32 %v175, %v175
  %v178 = vmul.f32 %v176, %v176
  %v179 = vadd.f32 %v177, 0.0
  %v180 = vadd.f32 %v178, 0.0
  %v181 = vld [vmem:[%s45] sm:$0xf]
  %v184 = vunpack.c.l.s4 1983009808
  %v185 = vunpack.c.0.s8 %v184
  %v186 = vlaneseq
  %v187 = vshrl.u32 %v186, 7
  %v188 = vsub.s32 %v185, %v187
  %v189 = vrot.slane %v181, %v188
  %v190 = vcombine.high %v189, %v189
  %193 = vrot.lane.b32.xlu0 %v189, 16
  %v194 = vpop.permute.xlu0 %193
  %195 = vrot.lane.b32.xlu0 %v190, 16
  %v196 = vpop.permute.xlu0 %195
  %v197 = vsel %vm172, %v194, %v196
  %v198 = vsel %vm172, %v196, %v194
  %v199 = vsub.f32 %v198, %v189
  %v200 = vsub.f32 %v197, %v190
  %v201 = vmul.f32 %v199, %v199
  %v202 = vmul.f32 %v200, %v200
  %v203 = vadd.f32 %v179, %v201
  %v204 = vadd.f32 %v180, %v202
  %v205 = vld [vmem:[%s70] sm:$0xf]
  %v208 = vunpack.c.l.s4 1983009808
  %v209 = vunpack.c.0.s8 %v208
  %v210 = vlaneseq
  %v211 = vshrl.u32 %v210, 7
  %v212 = vsub.s32 %v209, %v211
  %v213 = vrot.slane %v205, %v212
  %v214 = vcombine.high %v213, %v213
  %217 = vrot.lane.b32.xlu0 %v213, 16
  %v218 = vpop.permute.xlu0 %217
  %219 = vrot.lane.b32.xlu0 %v214, 16
  %v220 = vpop.permute.xlu0 %219
  %v221 = vsel %vm172, %v218, %v220
  %v222 = vsel %vm172, %v220, %v218
  %v223 = vsub.f32 %v222, %v213
  %v224 = vsub.f32 %v221, %v214
  %v225 = vmul.f32 %v223, %v223
  %v226 = vmul.f32 %v224, %v224
  %v227 = vadd.f32 %v203, %v225
  %v228 = vadd.f32 %v204, %v226
  %v229 = vld [vmem:[%s95] sm:$0xf]
  %v232 = vunpack.c.l.s4 1983009808
  %v233 = vunpack.c.0.s8 %v232
  %v234 = vlaneseq
  %v235 = vshrl.u32 %v234, 7
  %v236 = vsub.s32 %v233, %v235
  %v237 = vrot.slane %v229, %v236
  %v238 = vcombine.high %v237, %v237
  %241 = vrot.lane.b32.xlu0 %v237, 16
  %v242 = vpop.permute.xlu0 %241
  %243 = vrot.lane.b32.xlu0 %v238, 16
  %v244 = vpop.permute.xlu0 %243
  %v245 = vsel %vm172, %v242, %v244
  %v246 = vsel %vm172, %v244, %v242
  %v247 = vsub.f32 %v246, %v237
  %v248 = vsub.f32 %v245, %v238
  %v249 = vmul.f32 %v247, %v247
  %v250 = vmul.f32 %v248, %v248
  %v251 = vadd.f32 %v227, %v249
  %v252 = vadd.f32 %v228, %v250
  %s253 = scalar_lea.vmem %s0, 2
  %v254 = vld [vmem:[%s253] sm:$0x3]
  %v255 = vsub.f32 0.0, %v251
  %v256 = vsub.f32 0.0, %v252
  %v257 = vmul.f32 %v255, 2.0
  %v258 = vmul.f32 %v256, 2.0
  %v259 = vmul.f32 %v257, 1.442695
  %v260 = vpow.pop %v259
  %v261 = vmul.f32 %v258, 1.442695
  %v262 = vpow.pop %v261
  %v264 = vlaneseq
  %v265 = vshrl.u32 %v264, 7
  %v266 = vsub.s32 0, %v265
  %v267 = vrot.slane %v254, %v266
  %v268 = vlaneseq
  %v269 = vshrl.u32 %v268, 7
  %v270 = vsub.s32 1, %v269
  %v271 = vrot.slane %v254, %v270
  %v274 = vmul.f32 %v267, %v260
  %v275 = vmul.f32 %v271, %v262
  %v278 = vcombine.low %v274, %v275
  %v280 = vunpack.c.l.s4 1983009808
  %v281 = vunpack.c.0.s8 %v280
  %v282 = vlaneseq
  %v283 = vshrl.u32 %v282, 7
  %v284 = vsub.s32 %v281, %v283
  %v285 = vrot.slane %v278, %v284
  %s287 = scalar_lea.vmem [#allocation2], 4
  %288 = vst [vmem:[%s287] sm:$0xf] %v285
  %v289 = vadd.f32 %v154, %v274
  %v290 = vadd.f32 %v155, %v275
  %v291 = vld [vmem:[%s1] sm:$0xf]
  %v294 = vunpack.c.l.s4 1983009808
  %v295 = vunpack.c.0.s8 %v294
  %v296 = vlaneseq
  %v297 = vshrl.u32 %v296, 7
  %v298 = vsub.s32 %v295, %v297
  %v299 = vrot.slane %v291, %v298
  %v300 = vcombine.high %v299, %v299
  %303 = vrot.lane.b32.xlu0 %v299, 15
  %v304 = vpop.permute.xlu0 %303
  %305 = vrot.lane.b32.xlu0 %v300, 15
  %v306 = vpop.permute.xlu0 %305
  %vm307 = vcmp.lt.s32.totalorder %v35, 15
  %v308 = vsel %vm307, %v304, %v306
  %v309 = vsel %vm307, %v306, %v304
  %v310 = vsub.f32 %v309, %v299
  %v311 = vsub.f32 %v308, %v300
  %v312 = vmul.f32 %v310, %v310
  %v313 = vmul.f32 %v311, %v311
  %v314 = vadd.f32 %v312, 0.0
  %v315 = vadd.f32 %v313, 0.0
  %v316 = vld [vmem:[%s45] sm:$0xf]
  %v319 = vunpack.c.l.s4 1983009808
  %v320 = vunpack.c.0.s8 %v319
  %v321 = vlaneseq
  %v322 = vshrl.u32 %v321, 7
  %v323 = vsub.s32 %v320, %v322
  %v324 = vrot.slane %v316, %v323
  %v325 = vcombine.high %v324, %v324
  %328 = vrot.lane.b32.xlu0 %v324, 15
  %v329 = vpop.permute.xlu0 %328
  %330 = vrot.lane.b32.xlu0 %v325, 15
  %v331 = vpop.permute.xlu0 %330
  %v332 = vsel %vm307, %v329, %v331
  %v333 = vsel %vm307, %v331, %v329
  %v334 = vsub.f32 %v333, %v324
  %v335 = vsub.f32 %v332, %v325
  %v336 = vmul.f32 %v334, %v334
  %v337 = vmul.f32 %v335, %v335
  %v338 = vadd.f32 %v314, %v336
  %v339 = vadd.f32 %v315, %v337
  %v340 = vld [vmem:[%s70] sm:$0xf]
  %v343 = vunpack.c.l.s4 1983009808
  %v344 = vunpack.c.0.s8 %v343
  %v345 = vlaneseq
  %v346 = vshrl.u32 %v345, 7
  %v347 = vsub.s32 %v344, %v346
  %v348 = vrot.slane %v340, %v347
  %v349 = vcombine.high %v348, %v348
  %352 = vrot.lane.b32.xlu0 %v348, 15
  %v353 = vpop.permute.xlu0 %352
  %354 = vrot.lane.b32.xlu0 %v349, 15
  %v355 = vpop.permute.xlu0 %354
  %v356 = vsel %vm307, %v353, %v355
  %v357 = vsel %vm307, %v355, %v353
  %v358 = vsub.f32 %v357, %v348
  %v359 = vsub.f32 %v356, %v349
  %v360 = vmul.f32 %v358, %v358
  %v361 = vmul.f32 %v359, %v359
  %v362 = vadd.f32 %v338, %v360
  %v363 = vadd.f32 %v339, %v361
  %v364 = vld [vmem:[%s95] sm:$0xf]
  %v367 = vunpack.c.l.s4 1983009808
  %v368 = vunpack.c.0.s8 %v367
  %v369 = vlaneseq
  %v370 = vshrl.u32 %v369, 7
  %v371 = vsub.s32 %v368, %v370
  %v372 = vrot.slane %v364, %v371
  %v373 = vcombine.high %v372, %v372
  %376 = vrot.lane.b32.xlu0 %v372, 15
  %v377 = vpop.permute.xlu0 %376
  %378 = vrot.lane.b32.xlu0 %v373, 15
  %v379 = vpop.permute.xlu0 %378
  %v380 = vsel %vm307, %v377, %v379
  %v381 = vsel %vm307, %v379, %v377
  %v382 = vsub.f32 %v381, %v372
  %v383 = vsub.f32 %v380, %v373
  %v384 = vmul.f32 %v382, %v382
  %v385 = vmul.f32 %v383, %v383
  %v386 = vadd.f32 %v362, %v384
  %v387 = vadd.f32 %v363, %v385
  %s388 = scalar_lea.vmem %s0, 4
  %v389 = vld [vmem:[%s388] sm:$0x3]
  %v390 = vsub.f32 0.0, %v386
  %v391 = vsub.f32 0.0, %v387
  %v392 = vmul.f32 %v390, 2.0
  %v393 = vmul.f32 %v391, 2.0
  %v394 = vmul.f32 %v392, 1.442695
  %v395 = vpow.pop %v394
  %v396 = vmul.f32 %v393, 1.442695
  %v397 = vpow.pop %v396
  %v399 = vlaneseq
  %v400 = vshrl.u32 %v399, 7
  %v401 = vsub.s32 0, %v400
  %v402 = vrot.slane %v389, %v401
  %v403 = vlaneseq
  %v404 = vshrl.u32 %v403, 7
  %v405 = vsub.s32 1, %v404
  %v406 = vrot.slane %v389, %v405
  %v409 = vmul.f32 %v402, %v395
  %v410 = vmul.f32 %v406, %v397
  %v413 = vcombine.low %v409, %v410
  %v415 = vunpack.c.l.s4 1983009808
  %v416 = vunpack.c.0.s8 %v415
  %v417 = vlaneseq
  %v418 = vshrl.u32 %v417, 7
  %v419 = vsub.s32 %v416, %v418
  %v420 = vrot.slane %v413, %v419
  %s422 = scalar_lea.vmem [#allocation2], 8
  %423 = vst [vmem:[%s422] sm:$0xf] %v420
  %v424 = vadd.f32 %v289, %v409
  %v425 = vadd.f32 %v290, %v410
  %v426 = vld [vmem:[%s1] sm:$0xf]
  %v429 = vunpack.c.l.s4 1983009808
  %v430 = vunpack.c.0.s8 %v429
  %v431 = vlaneseq
  %v432 = vshrl.u32 %v431, 7
  %v433 = vsub.s32 %v430, %v432
  %v434 = vrot.slane %v426, %v433
  %v435 = vcombine.high %v434, %v434
  %438 = vrot.lane.b32.xlu0 %v434, 1
  %v439 = vpop.permute.xlu0 %438
  %440 = vrot.lane.b32.xlu0 %v435, 1
  %v441 = vpop.permute.xlu0 %440
  %vm442 = vcmp.lt.s32.totalorder %v35, 1
  %v443 = vsel %vm442, %v439, %v441
  %v444 = vsel %vm442, %v441, %v439
  %v445 = vsub.f32 %v444, %v434
  %v446 = vsub.f32 %v443, %v435
  %v447 = vmul.f32 %v445, %v445
  %v448 = vmul.f32 %v446, %v446
  %v449 = vadd.f32 %v447, 0.0
  %v450 = vadd.f32 %v448, 0.0
  %v451 = vld [vmem:[%s45] sm:$0xf]
  %v454 = vunpack.c.l.s4 1983009808
  %v455 = vunpack.c.0.s8 %v454
  %v456 = vlaneseq
  %v457 = vshrl.u32 %v456, 7
  %v458 = vsub.s32 %v455, %v457
  %v459 = vrot.slane %v451, %v458
  %v460 = vcombine.high %v459, %v459
  %463 = vrot.lane.b32.xlu0 %v459, 1
  %v464 = vpop.permute.xlu0 %463
  %465 = vrot.lane.b32.xlu0 %v460, 1
  %v466 = vpop.permute.xlu0 %465
  %v467 = vsel %vm442, %v464, %v466
  %v468 = vsel %vm442, %v466, %v464
  %v469 = vsub.f32 %v468, %v459
  %v470 = vsub.f32 %v467, %v460
  %v471 = vmul.f32 %v469, %v469
  %v472 = vmul.f32 %v470, %v470
  %v473 = vadd.f32 %v449, %v471
  %v474 = vadd.f32 %v450, %v472
  %v475 = vld [vmem:[%s70] sm:$0xf]
  %v478 = vunpack.c.l.s4 1983009808
  %v479 = vunpack.c.0.s8 %v478
  %v480 = vlaneseq
  %v481 = vshrl.u32 %v480, 7
  %v482 = vsub.s32 %v479, %v481
  %v483 = vrot.slane %v475, %v482
  %v484 = vcombine.high %v483, %v483
  %487 = vrot.lane.b32.xlu0 %v483, 1
  %v488 = vpop.permute.xlu0 %487
  %489 = vrot.lane.b32.xlu0 %v484, 1
  %v490 = vpop.permute.xlu0 %489
  %v491 = vsel %vm442, %v488, %v490
  %v492 = vsel %vm442, %v490, %v488
  %v493 = vsub.f32 %v492, %v483
  %v494 = vsub.f32 %v491, %v484
  %v495 = vmul.f32 %v493, %v493
  %v496 = vmul.f32 %v494, %v494
  %v497 = vadd.f32 %v473, %v495
  %v498 = vadd.f32 %v474, %v496
  %v499 = vld [vmem:[%s95] sm:$0xf]
  %v502 = vunpack.c.l.s4 1983009808
  %v503 = vunpack.c.0.s8 %v502
  %v504 = vlaneseq
  %v505 = vshrl.u32 %v504, 7
  %v506 = vsub.s32 %v503, %v505
  %v507 = vrot.slane %v499, %v506
  %v508 = vcombine.high %v507, %v507
  %511 = vrot.lane.b32.xlu0 %v507, 1
  %v512 = vpop.permute.xlu0 %511
  %513 = vrot.lane.b32.xlu0 %v508, 1
  %v514 = vpop.permute.xlu0 %513
  %v515 = vsel %vm442, %v512, %v514
  %v516 = vsel %vm442, %v514, %v512
  %v517 = vsub.f32 %v516, %v507
  %v518 = vsub.f32 %v515, %v508
  %v519 = vmul.f32 %v517, %v517
  %v520 = vmul.f32 %v518, %v518
  %v521 = vadd.f32 %v497, %v519
  %v522 = vadd.f32 %v498, %v520
  %s523 = scalar_lea.vmem %s0, 6
  %v524 = vld [vmem:[%s523] sm:$0x3]
  %v525 = vsub.f32 0.0, %v521
  %v526 = vsub.f32 0.0, %v522
  %v527 = vmul.f32 %v525, 2.0
  %v528 = vmul.f32 %v526, 2.0
  %v529 = vmul.f32 %v527, 1.442695
  %v530 = vpow.pop %v529
  %v531 = vmul.f32 %v528, 1.442695
  %v532 = vpow.pop %v531
  %v534 = vlaneseq
  %v535 = vshrl.u32 %v534, 7
  %v536 = vsub.s32 0, %v535
  %v537 = vrot.slane %v524, %v536
  %v538 = vlaneseq
  %v539 = vshrl.u32 %v538, 7
  %v540 = vsub.s32 1, %v539
  %v541 = vrot.slane %v524, %v540
  %v544 = vmul.f32 %v537, %v530
  %v545 = vmul.f32 %v541, %v532
  %v548 = vcombine.low %v544, %v545
  %v550 = vunpack.c.l.s4 1983009808
  %v551 = vunpack.c.0.s8 %v550
  %v552 = vlaneseq
  %v553 = vshrl.u32 %v552, 7
  %v554 = vsub.s32 %v551, %v553
  %v555 = vrot.slane %v548, %v554
  %s557 = scalar_lea.vmem [#allocation2], 12
  %558 = vst [vmem:[%s557] sm:$0xf] %v555
  %v559 = vadd.f32 %v424, %v544
  %v560 = vadd.f32 %v425, %v545
  %s561 = scalar_lea.vmem %s0, 8
  %v562 = vld [vmem:[%s561] sm:$0x3]
  %v564 = vlaneseq
  %v565 = vshrl.u32 %v564, 7
  %v566 = vsub.s32 0, %v565
  %v567 = vrot.slane %v562, %v566
  %v568 = vlaneseq
  %v569 = vshrl.u32 %v568, 7
  %v570 = vsub.s32 1, %v569
  %v571 = vrot.slane %v562, %v570
  %v574 = vcombine.low %v567, %v571
  %v576 = vunpack.c.l.s4 1983009808
  %v577 = vunpack.c.0.s8 %v576
  %v578 = vlaneseq
  %v579 = vshrl.u32 %v578, 7
  %v580 = vsub.s32 %v577, %v579
  %v581 = vrot.slane %v574, %v580
  %s583 = scalar_lea.vmem [#allocation2], 16
  %584 = vst [vmem:[%s583] sm:$0xf] %v581
  %v585 = vadd.f32 %v559, %v567
  %v586 = vadd.f32 %v560, %v571
  %v587 = vld [vmem:[%s1] sm:$0xf]
  %v590 = vunpack.c.l.s4 1983009808
  %v591 = vunpack.c.0.s8 %v590
  %v592 = vlaneseq
  %v593 = vshrl.u32 %v592, 7
  %v594 = vsub.s32 %v591, %v593
  %v595 = vrot.slane %v587, %v594
  %v596 = vcombine.high %v595, %v595
  %599 = vrot.lane.b32.xlu0 %v595, 127
  %v600 = vpop.permute.xlu0 %599
  %601 = vrot.lane.b32.xlu0 %v596, 127
  %v602 = vpop.permute.xlu0 %601
  %vm603 = vcmp.lt.s32.totalorder %v35, 127
  %v604 = vsel %vm603, %v600, %v602
  %v605 = vsel %vm603, %v602, %v600
  %v606 = vsub.f32 %v604, %v595
  %v607 = vsub.f32 %v605, %v596
  %v608 = vmul.f32 %v606, %v606
  %v609 = vmul.f32 %v607, %v607
  %v610 = vadd.f32 %v608, 0.0
  %v611 = vadd.f32 %v609, 0.0
  %v612 = vld [vmem:[%s45] sm:$0xf]
  %v615 = vunpack.c.l.s4 1983009808
  %v616 = vunpack.c.0.s8 %v615
  %v617 = vlaneseq
  %v618 = vshrl.u32 %v617, 7
  %v619 = vsub.s32 %v616, %v618
  %v620 = vrot.slane %v612, %v619
  %v621 = vcombine.high %v620, %v620
  %624 = vrot.lane.b32.xlu0 %v620, 127
  %v625 = vpop.permute.xlu0 %624
  %626 = vrot.lane.b32.xlu0 %v621, 127
  %v627 = vpop.permute.xlu0 %626
  %v628 = vsel %vm603, %v625, %v627
  %v629 = vsel %vm603, %v627, %v625
  %v630 = vsub.f32 %v628, %v620
  %v631 = vsub.f32 %v629, %v621
  %v632 = vmul.f32 %v630, %v630
  %v633 = vmul.f32 %v631, %v631
  %v634 = vadd.f32 %v610, %v632
  %v635 = vadd.f32 %v611, %v633
  %v636 = vld [vmem:[%s70] sm:$0xf]
  %v639 = vunpack.c.l.s4 1983009808
  %v640 = vunpack.c.0.s8 %v639
  %v641 = vlaneseq
  %v642 = vshrl.u32 %v641, 7
  %v643 = vsub.s32 %v640, %v642
  %v644 = vrot.slane %v636, %v643
  %v645 = vcombine.high %v644, %v644
  %648 = vrot.lane.b32.xlu0 %v644, 127
  %v649 = vpop.permute.xlu0 %648
  %650 = vrot.lane.b32.xlu0 %v645, 127
  %v651 = vpop.permute.xlu0 %650
  %v652 = vsel %vm603, %v649, %v651
  %v653 = vsel %vm603, %v651, %v649
  %v654 = vsub.f32 %v652, %v644
  %v655 = vsub.f32 %v653, %v645
  %v656 = vmul.f32 %v654, %v654
  %v657 = vmul.f32 %v655, %v655
  %v658 = vadd.f32 %v634, %v656
  %v659 = vadd.f32 %v635, %v657
  %v660 = vld [vmem:[%s95] sm:$0xf]
  %v663 = vunpack.c.l.s4 1983009808
  %v664 = vunpack.c.0.s8 %v663
  %v665 = vlaneseq
  %v666 = vshrl.u32 %v665, 7
  %v667 = vsub.s32 %v664, %v666
  %v668 = vrot.slane %v660, %v667
  %v669 = vcombine.high %v668, %v668
  %672 = vrot.lane.b32.xlu0 %v668, 127
  %v673 = vpop.permute.xlu0 %672
  %674 = vrot.lane.b32.xlu0 %v669, 127
  %v675 = vpop.permute.xlu0 %674
  %v676 = vsel %vm603, %v673, %v675
  %v677 = vsel %vm603, %v675, %v673
  %v678 = vsub.f32 %v676, %v668
  %v679 = vsub.f32 %v677, %v669
  %v680 = vmul.f32 %v678, %v678
  %v681 = vmul.f32 %v679, %v679
  %v682 = vadd.f32 %v658, %v680
  %v683 = vadd.f32 %v659, %v681
  %s684 = scalar_lea.vmem %s0, 10
  %v685 = vld [vmem:[%s684] sm:$0x3]
  %v686 = vsub.f32 0.0, %v682
  %v687 = vsub.f32 0.0, %v683
  %v688 = vmul.f32 %v686, 2.0
  %v689 = vmul.f32 %v687, 2.0
  %v690 = vmul.f32 %v688, 1.442695
  %v691 = vpow.pop %v690
  %v692 = vmul.f32 %v689, 1.442695
  %v693 = vpow.pop %v692
  %v695 = vlaneseq
  %v696 = vshrl.u32 %v695, 7
  %v697 = vsub.s32 0, %v696
  %v698 = vrot.slane %v685, %v697
  %v699 = vlaneseq
  %v700 = vshrl.u32 %v699, 7
  %v701 = vsub.s32 1, %v700
  %v702 = vrot.slane %v685, %v701
  %v705 = vmul.f32 %v698, %v691
  %v706 = vmul.f32 %v702, %v693
  %v709 = vcombine.low %v705, %v706
  %v711 = vunpack.c.l.s4 1983009808
  %v712 = vunpack.c.0.s8 %v711
  %v713 = vlaneseq
  %v714 = vshrl.u32 %v713, 7
  %v715 = vsub.s32 %v712, %v714
  %v716 = vrot.slane %v709, %v715
  %s718 = scalar_lea.vmem [#allocation2], 20
  %719 = vst [vmem:[%s718] sm:$0xf] %v716
  %v720 = vadd.f32 %v585, %v705
  %v721 = vadd.f32 %v586, %v706
  %v722 = vld [vmem:[%s1] sm:$0xf]
  %v725 = vunpack.c.l.s4 1983009808
  %v726 = vunpack.c.0.s8 %v725
  %v727 = vlaneseq
  %v728 = vshrl.u32 %v727, 7
  %v729 = vsub.s32 %v726, %v728
  %v730 = vrot.slane %v722, %v729
  %v731 = vcombine.high %v730, %v730
  %734 = vrot.lane.b32.xlu0 %v730, 113
  %v735 = vpop.permute.xlu0 %734
  %736 = vrot.lane.b32.xlu0 %v731, 113
  %v737 = vpop.permute.xlu0 %736
  %vm738 = vcmp.lt.s32.totalorder %v35, 113
  %v739 = vsel %vm738, %v735, %v737
  %v740 = vsel %vm738, %v737, %v735
  %v741 = vsub.f32 %v739, %v730
  %v742 = vsub.f32 %v740, %v731
  %v743 = vmul.f32 %v741, %v741
  %v744 = vmul.f32 %v742, %v742
  %v745 = vadd.f32 %v743, 0.0
  %v746 = vadd.f32 %v744, 0.0
  %v747 = vld [vmem:[%s45] sm:$0xf]
  %v750 = vunpack.c.l.s4 1983009808
  %v751 = vunpack.c.0.s8 %v750
  %v752 = vlaneseq
  %v753 = vshrl.u32 %v752, 7
  %v754 = vsub.s32 %v751, %v753
  %v755 = vrot.slane %v747, %v754
  %v756 = vcombine.high %v755, %v755
  %759 = vrot.lane.b32.xlu0 %v755, 113
  %v760 = vpop.permute.xlu0 %759
  %761 = vrot.lane.b32.xlu0 %v756, 113
  %v762 = vpop.permute.xlu0 %761
  %v763 = vsel %vm738, %v760, %v762
  %v764 = vsel %vm738, %v762, %v760
  %v765 = vsub.f32 %v763, %v755
  %v766 = vsub.f32 %v764, %v756
  %v767 = vmul.f32 %v765, %v765
  %v768 = vmul.f32 %v766, %v766
  %v769 = vadd.f32 %v745, %v767
  %v770 = vadd.f32 %v746, %v768
  %v771 = vld [vmem:[%s70] sm:$0xf]
  %v774 = vunpack.c.l.s4 1983009808
  %v775 = vunpack.c.0.s8 %v774
  %v776 = vlaneseq
  %v777 = vshrl.u32 %v776, 7
  %v778 = vsub.s32 %v775, %v777
  %v779 = vrot.slane %v771, %v778
  %v780 = vcombine.high %v779, %v779
  %783 = vrot.lane.b32.xlu0 %v779, 113
  %v784 = vpop.permute.xlu0 %783
  %785 = vrot.lane.b32.xlu0 %v780, 113
  %v786 = vpop.permute.xlu0 %785
  %v787 = vsel %vm738, %v784, %v786
  %v788 = vsel %vm738, %v786, %v784
  %v789 = vsub.f32 %v787, %v779
  %v790 = vsub.f32 %v788, %v780
  %v791 = vmul.f32 %v789, %v789
  %v792 = vmul.f32 %v790, %v790
  %v793 = vadd.f32 %v769, %v791
  %v794 = vadd.f32 %v770, %v792
  %v795 = vld [vmem:[%s95] sm:$0xf]
  %v798 = vunpack.c.l.s4 1983009808
  %v799 = vunpack.c.0.s8 %v798
  %v800 = vlaneseq
  %v801 = vshrl.u32 %v800, 7
  %v802 = vsub.s32 %v799, %v801
  %v803 = vrot.slane %v795, %v802
  %v804 = vcombine.high %v803, %v803
  %807 = vrot.lane.b32.xlu0 %v803, 113
  %v808 = vpop.permute.xlu0 %807
  %809 = vrot.lane.b32.xlu0 %v804, 113
  %v810 = vpop.permute.xlu0 %809
  %v811 = vsel %vm738, %v808, %v810
  %v812 = vsel %vm738, %v810, %v808
  %v813 = vsub.f32 %v811, %v803
  %v814 = vsub.f32 %v812, %v804
  %v815 = vmul.f32 %v813, %v813
  %v816 = vmul.f32 %v814, %v814
  %v817 = vadd.f32 %v793, %v815
  %v818 = vadd.f32 %v794, %v816
  %s819 = scalar_lea.vmem %s0, 12
  %v820 = vld [vmem:[%s819] sm:$0x3]
  %v821 = vsub.f32 0.0, %v817
  %v822 = vsub.f32 0.0, %v818
  %v823 = vmul.f32 %v821, 2.0
  %v824 = vmul.f32 %v822, 2.0
  %v825 = vmul.f32 %v823, 1.442695
  %v826 = vpow.pop %v825
  %v827 = vmul.f32 %v824, 1.442695
  %v828 = vpow.pop %v827
  %v830 = vlaneseq
  %v831 = vshrl.u32 %v830, 7
  %v832 = vsub.s32 0, %v831
  %v833 = vrot.slane %v820, %v832
  %v834 = vlaneseq
  %v835 = vshrl.u32 %v834, 7
  %v836 = vsub.s32 1, %v835
  %v837 = vrot.slane %v820, %v836
  %v840 = vmul.f32 %v833, %v826
  %v841 = vmul.f32 %v837, %v828
  %v844 = vcombine.low %v840, %v841
  %v846 = vunpack.c.l.s4 1983009808
  %v847 = vunpack.c.0.s8 %v846
  %v848 = vlaneseq
  %v849 = vshrl.u32 %v848, 7
  %v850 = vsub.s32 %v847, %v849
  %v851 = vrot.slane %v844, %v850
  %s853 = scalar_lea.vmem [#allocation2], 24
  %854 = vst [vmem:[%s853] sm:$0xf] %v851
  %v855 = vadd.f32 %v720, %v840
  %v856 = vadd.f32 %v721, %v841
  %v857 = vld [vmem:[%s1] sm:$0xf]
  %v860 = vunpack.c.l.s4 1983009808
  %v861 = vunpack.c.0.s8 %v860
  %v862 = vlaneseq
  %v863 = vshrl.u32 %v862, 7
  %v864 = vsub.s32 %v861, %v863
  %v865 = vrot.slane %v857, %v864
  %v866 = vcombine.high %v865, %v865
  %869 = vrot.lane.b32.xlu0 %v865, 112
  %v870 = vpop.permute.xlu0 %869
  %871 = vrot.lane.b32.xlu0 %v866, 112
  %v872 = vpop.permute.xlu0 %871
  %vm873 = vcmp.lt.s32.totalorder %v35, 112
  %v874 = vsel %vm873, %v870, %v872
  %v875 = vsel %vm873, %v872, %v870
  %v876 = vsub.f32 %v874, %v865
  %v877 = vsub.f32 %v875, %v866
  %v878 = vmul.f32 %v876, %v876
  %v879 = vmul.f32 %v877, %v877
  %v880 = vadd.f32 %v878, 0.0
  %v881 = vadd.f32 %v879, 0.0
  %v882 = vld [vmem:[%s45] sm:$0xf]
  %v885 = vunpack.c.l.s4 1983009808
  %v886 = vunpack.c.0.s8 %v885
  %v887 = vlaneseq
  %v888 = vshrl.u32 %v887, 7
  %v889 = vsub.s32 %v886, %v888
  %v890 = vrot.slane %v882, %v889
  %v891 = vcombine.high %v890, %v890
  %894 = vrot.lane.b32.xlu0 %v890, 112
  %v895 = vpop.permute.xlu0 %894
  %896 = vrot.lane.b32.xlu0 %v891, 112
  %v897 = vpop.permute.xlu0 %896
  %v898 = vsel %vm873, %v895, %v897
  %v899 = vsel %vm873, %v897, %v895
  %v900 = vsub.f32 %v898, %v890
  %v901 = vsub.f32 %v899, %v891
  %v902 = vmul.f32 %v900, %v900
  %v903 = vmul.f32 %v901, %v901
  %v904 = vadd.f32 %v880, %v902
  %v905 = vadd.f32 %v881, %v903
  %v906 = vld [vmem:[%s70] sm:$0xf]
  %v909 = vunpack.c.l.s4 1983009808
  %v910 = vunpack.c.0.s8 %v909
  %v911 = vlaneseq
  %v912 = vshrl.u32 %v911, 7
  %v913 = vsub.s32 %v910, %v912
  %v914 = vrot.slane %v906, %v913
  %v915 = vcombine.high %v914, %v914
  %918 = vrot.lane.b32.xlu0 %v914, 112
  %v919 = vpop.permute.xlu0 %918
  %920 = vrot.lane.b32.xlu0 %v915, 112
  %v921 = vpop.permute.xlu0 %920
  %v922 = vsel %vm873, %v919, %v921
  %v923 = vsel %vm873, %v921, %v919
  %v924 = vsub.f32 %v922, %v914
  %v925 = vsub.f32 %v923, %v915
  %v926 = vmul.f32 %v924, %v924
  %v927 = vmul.f32 %v925, %v925
  %v928 = vadd.f32 %v904, %v926
  %v929 = vadd.f32 %v905, %v927
  %v930 = vld [vmem:[%s95] sm:$0xf]
  %v933 = vunpack.c.l.s4 1983009808
  %v934 = vunpack.c.0.s8 %v933
  %v935 = vlaneseq
  %v936 = vshrl.u32 %v935, 7
  %v937 = vsub.s32 %v934, %v936
  %v938 = vrot.slane %v930, %v937
  %v939 = vcombine.high %v938, %v938
  %942 = vrot.lane.b32.xlu0 %v938, 112
  %v943 = vpop.permute.xlu0 %942
  %944 = vrot.lane.b32.xlu0 %v939, 112
  %v945 = vpop.permute.xlu0 %944
  %v946 = vsel %vm873, %v943, %v945
  %v947 = vsel %vm873, %v945, %v943
  %v948 = vsub.f32 %v946, %v938
  %v949 = vsub.f32 %v947, %v939
  %v950 = vmul.f32 %v948, %v948
  %v951 = vmul.f32 %v949, %v949
  %v952 = vadd.f32 %v928, %v950
  %v953 = vadd.f32 %v929, %v951
  %s954 = scalar_lea.vmem %s0, 14
  %v955 = vld [vmem:[%s954] sm:$0x3]
  %v956 = vsub.f32 0.0, %v952
  %v957 = vsub.f32 0.0, %v953
  %v958 = vmul.f32 %v956, 2.0
  %v959 = vmul.f32 %v957, 2.0
  %v960 = vmul.f32 %v958, 1.442695
  %v961 = vpow.pop %v960
  %v962 = vmul.f32 %v959, 1.442695
  %v963 = vpow.pop %v962
  %v965 = vlaneseq
  %v966 = vshrl.u32 %v965, 7
  %v967 = vsub.s32 0, %v966
  %v968 = vrot.slane %v955, %v967
  %v969 = vlaneseq
  %v970 = vshrl.u32 %v969, 7
  %v971 = vsub.s32 1, %v970
  %v972 = vrot.slane %v955, %v971
  %v975 = vmul.f32 %v968, %v961
  %v976 = vmul.f32 %v972, %v963
  %v979 = vcombine.low %v975, %v976
  %v981 = vunpack.c.l.s4 1983009808
  %v982 = vunpack.c.0.s8 %v981
  %v983 = vlaneseq
  %v984 = vshrl.u32 %v983, 7
  %v985 = vsub.s32 %v982, %v984
  %v986 = vrot.slane %v979, %v985
  %s988 = scalar_lea.vmem [#allocation2], 28
  %989 = vst [vmem:[%s988] sm:$0xf] %v986
  %v990 = vadd.f32 %v855, %v975
  %v991 = vadd.f32 %v856, %v976
  %v992 = vld [vmem:[%s1] sm:$0xf]
  %v995 = vunpack.c.l.s4 1983009808
  %v996 = vunpack.c.0.s8 %v995
  %v997 = vlaneseq
  %v998 = vshrl.u32 %v997, 7
  %v999 = vsub.s32 %v996, %v998
  %v1000 = vrot.slane %v992, %v999
  %v1001 = vcombine.high %v1000, %v1000
  %1004 = vrot.lane.b32.xlu0 %v1000, 111
  %v1005 = vpop.permute.xlu0 %1004
  %1006 = vrot.lane.b32.xlu0 %v1001, 111
  %v1007 = vpop.permute.xlu0 %1006
  %vm1008 = vcmp.lt.s32.totalorder %v35, 111
  %v1009 = vsel %vm1008, %v1005, %v1007
  %v1010 = vsel %vm1008, %v1007, %v1005
  %v1011 = vsub.f32 %v1009, %v1000
  %v1012 = vsub.f32 %v1010, %v1001
  %v1013 = vmul.f32 %v1011, %v1011
  %v1014 = vmul.f32 %v1012, %v1012
  %v1015 = vadd.f32 %v1013, 0.0
  %v1016 = vadd.f32 %v1014, 0.0
  %v1017 = vld [vmem:[%s45] sm:$0xf]
  %v1020 = vunpack.c.l.s4 1983009808
  %v1021 = vunpack.c.0.s8 %v1020
  %v1022 = vlaneseq
  %v1023 = vshrl.u32 %v1022, 7
  %v1024 = vsub.s32 %v1021, %v1023
  %v1025 = vrot.slane %v1017, %v1024
  %v1026 = vcombine.high %v1025, %v1025
  %1029 = vrot.lane.b32.xlu0 %v1025, 111
  %v1030 = vpop.permute.xlu0 %1029
  %1031 = vrot.lane.b32.xlu0 %v1026, 111
  %v1032 = vpop.permute.xlu0 %1031
  %v1033 = vsel %vm1008, %v1030, %v1032
  %v1034 = vsel %vm1008, %v1032, %v1030
  %v1035 = vsub.f32 %v1033, %v1025
  %v1036 = vsub.f32 %v1034, %v1026
  %v1037 = vmul.f32 %v1035, %v1035
  %v1038 = vmul.f32 %v1036, %v1036
  %v1039 = vadd.f32 %v1015, %v1037
  %v1040 = vadd.f32 %v1016, %v1038
  %v1041 = vld [vmem:[%s70] sm:$0xf]
  %v1044 = vunpack.c.l.s4 1983009808
  %v1045 = vunpack.c.0.s8 %v1044
  %v1046 = vlaneseq
  %v1047 = vshrl.u32 %v1046, 7
  %v1048 = vsub.s32 %v1045, %v1047
  %v1049 = vrot.slane %v1041, %v1048
  %v1050 = vcombine.high %v1049, %v1049
  %1053 = vrot.lane.b32.xlu0 %v1049, 111
  %v1054 = vpop.permute.xlu0 %1053
  %1055 = vrot.lane.b32.xlu0 %v1050, 111
  %v1056 = vpop.permute.xlu0 %1055
  %v1057 = vsel %vm1008, %v1054, %v1056
  %v1058 = vsel %vm1008, %v1056, %v1054
  %v1059 = vsub.f32 %v1057, %v1049
  %v1060 = vsub.f32 %v1058, %v1050
  %v1061 = vmul.f32 %v1059, %v1059
  %v1062 = vmul.f32 %v1060, %v1060
  %v1063 = vadd.f32 %v1039, %v1061
  %v1064 = vadd.f32 %v1040, %v1062
  %v1065 = vld [vmem:[%s95] sm:$0xf]
  %v1068 = vunpack.c.l.s4 1983009808
  %v1069 = vunpack.c.0.s8 %v1068
  %v1070 = vlaneseq
  %v1071 = vshrl.u32 %v1070, 7
  %v1072 = vsub.s32 %v1069, %v1071
  %v1073 = vrot.slane %v1065, %v1072
  %v1074 = vcombine.high %v1073, %v1073
  %1077 = vrot.lane.b32.xlu0 %v1073, 111
  %v1078 = vpop.permute.xlu0 %1077
  %1079 = vrot.lane.b32.xlu0 %v1074, 111
  %v1080 = vpop.permute.xlu0 %1079
  %v1081 = vsel %vm1008, %v1078, %v1080
  %v1082 = vsel %vm1008, %v1080, %v1078
  %v1083 = vsub.f32 %v1081, %v1073
  %v1084 = vsub.f32 %v1082, %v1074
  %v1085 = vmul.f32 %v1083, %v1083
  %v1086 = vmul.f32 %v1084, %v1084
  %v1087 = vadd.f32 %v1063, %v1085
  %v1088 = vadd.f32 %v1064, %v1086
  %s1089 = scalar_lea.vmem %s0, 16
  %v1090 = vld [vmem:[%s1089] sm:$0x3]
  %v1091 = vsub.f32 0.0, %v1087
  %v1092 = vsub.f32 0.0, %v1088
  %v1093 = vmul.f32 %v1091, 2.0
  %v1094 = vmul.f32 %v1092, 2.0
  %v1095 = vmul.f32 %v1093, 1.442695
  %v1096 = vpow.pop %v1095
  %v1097 = vmul.f32 %v1094, 1.442695
  %v1098 = vpow.pop %v1097
  %v1100 = vlaneseq
  %v1101 = vshrl.u32 %v1100, 7
  %v1102 = vsub.s32 0, %v1101
  %v1103 = vrot.slane %v1090, %v1102
  %v1104 = vlaneseq
  %v1105 = vshrl.u32 %v1104, 7
  %v1106 = vsub.s32 1, %v1105
  %v1107 = vrot.slane %v1090, %v1106
  %v1110 = vmul.f32 %v1103, %v1096
  %v1111 = vmul.f32 %v1107, %v1098
  %v1114 = vcombine.low %v1110, %v1111
  %v1116 = vunpack.c.l.s4 1983009808
  %v1117 = vunpack.c.0.s8 %v1116
  %v1118 = vlaneseq
  %v1119 = vshrl.u32 %v1118, 7
  %v1120 = vsub.s32 %v1117, %v1119
  %v1121 = vrot.slane %v1114, %v1120
  %s1123 = scalar_lea.vmem [#allocation2], 32
  %1124 = vst [vmem:[%s1123] sm:$0xf] %v1121
  %v1125 = vadd.f32 %v990, %v1110
  %v1126 = vadd.f32 %v991, %v1111
  %vm1127 = vcmp.gt.f32.partialorder %v17, 0.0
  %v1128 = vmul.f32 %v1125, 0.5
  %v1129 = vmul.f32 %v1126, 0.5
  %v1130 = vmax.f32 %v17, 1e-30
  %v1131 = vlog2.pop %v1130
  %v1132 = vmul.f32 %v1131, 0.6931472
  %v1133 = vmul.f32 %v1132, 2.4916444
  %v1136 = vunpack.c.l.s4 1983009808
  %v1137 = vunpack.c.0.s8 %v1136
  %v1138 = vlaneseq
  %v1139 = vshrl.u32 %v1138, 7
  %v1140 = vsub.s32 %v1137, %v1139
  %v1141 = vrot.slane %v1133, %v1140
  %v1142 = vcombine.high %v1141, %v1141
  %v1145 = vsub.f32 %v1128, %v1141
  %v1146 = vsub.f32 %v1129, %v1142
  %v1149 = vcombine.low %v1145, %v1146
  %v1151 = vunpack.c.l.s4 1983009808
  %v1152 = vunpack.c.0.s8 %v1151
  %v1153 = vlaneseq
  %v1154 = vshrl.u32 %v1153, 7
  %v1155 = vsub.s32 %v1152, %v1154
  %v1156 = vrot.slane %v1149, %v1155
  %v1158 = vsel %vm1127, %v1156, 3e+38
  %1159 = vst [vmem:[#allocation3] sm:$0xf] %v1158
  %v1160 = vld [vmem:[%s2] sm:$0xf]
  %v1161 = vmul.f32 %v1160, %v17
  %vm1162 = vcmp.gt.f32.partialorder %v1161, 0.5
  %v1163 = vsel %vm1162, 1.0, 0.0
  loop: start=0, step=1, limit=20
  $region18: #{mean_field_forward.1} parent=0 // loop_pre_header
    _
  $region19: #{mean_field_forward.1} parent=0 // loop_header
    %s1165 = sphi 0, %s1169
    %p1166 = scmp.ge.s32.totalorder %s1165, 20
    %v1170 = vphi %v1163, %v1347
  $region20: #{mean_field_forward.1} parent=0 // loop_header_branch
    %1168 = sbr.rel (%p1166) target = $region24
  $region21: #{mean_field_forward.1} parent=0 // loop_body
    %v1173 = vunpack.c.l.s4 1983009808
    %v1174 = vunpack.c.0.s8 %v1173
    %v1175 = vlaneseq
    %v1176 = vshrl.u32 %v1175, 7
    %v1177 = vsub.s32 %v1174, %v1176
    %v1178 = vrot.slane %v1170, %v1177
    %v1179 = vcombine.high %v1178, %v1178
    %1182 = vrot.lane.b32.xlu0 %v1178, 17
    %v1183 = vpop.permute.xlu0 %1182
    %1184 = vrot.lane.b32.xlu0 %v1179, 17
    %v1185 = vpop.permute.xlu0 %1184
    %v1186 = vsel %vm36, %v1183, %v1185
    %v1187 = vsel %vm36, %v1185, %v1183
    %v1188 = vld [vmem:[#allocation2] sm:$0xf]
    %v1191 = vcombine.low %v1187, %v1186
    %v1193 = vunpack.c.l.s4 1983009808
    %v1194 = vunpack.c.0.s8 %v1193
    %v1195 = vlaneseq
    %v1196 = vshrl.u32 %v1195, 7
    %v1197 = vsub.s32 %v1194, %v1196
    %v1198 = vrot.slane %v1191, %v1197
    %v1200 = vmul.f32 %v1188, %v1198
    %v1201 = vadd.f32 %v1200, 0.0
    %1202 = vrot.lane.b32.xlu0 %v1178, 16
    %v1203 = vpop.permute.xlu0 %1202
    %1204 = vrot.lane.b32.xlu0 %v1179, 16
    %v1205 = vpop.permute.xlu0 %1204
    %v1206 = vsel %vm172, %v1203, %v1205
    %v1207 = vsel %vm172, %v1205, %v1203
    %v1208 = vld [vmem:[%s287] sm:$0xf]
    %v1211 = vcombine.low %v1207, %v1206
    %v1213 = vunpack.c.l.s4 1983009808
    %v1214 = vunpack.c.0.s8 %v1213
    %v1215 = vlaneseq
    %v1216 = vshrl.u32 %v1215, 7
    %v1217 = vsub.s32 %v1214, %v1216
    %v1218 = vrot.slane %v1211, %v1217
    %v1220 = vmul.f32 %v1208, %v1218
    %v1221 = vadd.f32 %v1201, %v1220
    %1222 = vrot.lane.b32.xlu0 %v1178, 15
    %v1223 = vpop.permute.xlu0 %1222
    %1224 = vrot.lane.b32.xlu0 %v1179, 15
    %v1225 = vpop.permute.xlu0 %1224
    %v1226 = vsel %vm307, %v1223, %v1225
    %v1227 = vsel %vm307, %v1225, %v1223
    %v1228 = vld [vmem:[%s422] sm:$0xf]
    %v1231 = vcombine.low %v1227, %v1226
    %v1233 = vunpack.c.l.s4 1983009808
    %v1234 = vunpack.c.0.s8 %v1233
    %v1235 = vlaneseq
    %v1236 = vshrl.u32 %v1235, 7
    %v1237 = vsub.s32 %v1234, %v1236
    %v1238 = vrot.slane %v1231, %v1237
    %v1240 = vmul.f32 %v1228, %v1238
    %v1241 = vadd.f32 %v1221, %v1240
    %1242 = vrot.lane.b32.xlu0 %v1178, 1
    %v1243 = vpop.permute.xlu0 %1242
    %1244 = vrot.lane.b32.xlu0 %v1179, 1
    %v1245 = vpop.permute.xlu0 %1244
    %v1246 = vsel %vm442, %v1243, %v1245
    %v1247 = vsel %vm442, %v1245, %v1243
    %v1248 = vld [vmem:[%s557] sm:$0xf]
    %v1251 = vcombine.low %v1247, %v1246
    %v1253 = vunpack.c.l.s4 1983009808
    %v1254 = vunpack.c.0.s8 %v1253
    %v1255 = vlaneseq
    %v1256 = vshrl.u32 %v1255, 7
    %v1257 = vsub.s32 %v1254, %v1256
    %v1258 = vrot.slane %v1251, %v1257
    %v1260 = vmul.f32 %v1248, %v1258
    %v1261 = vadd.f32 %v1241, %v1260
    %v1262 = vld [vmem:[%s583] sm:$0xf]
    %v1263 = vmul.f32 %v1262, %v1170
    %v1264 = vadd.f32 %v1261, %v1263
    %1265 = vrot.lane.b32.xlu0 %v1178, 127
    %v1266 = vpop.permute.xlu0 %1265
    %1267 = vrot.lane.b32.xlu0 %v1179, 127
    %v1268 = vpop.permute.xlu0 %1267
    %v1269 = vsel %vm603, %v1266, %v1268
    %v1270 = vsel %vm603, %v1268, %v1266
    %v1271 = vld [vmem:[%s718] sm:$0xf]
    %v1274 = vcombine.low %v1269, %v1270
    %v1276 = vunpack.c.l.s4 1983009808
    %v1277 = vunpack.c.0.s8 %v1276
    %v1278 = vlaneseq
    %v1279 = vshrl.u32 %v1278, 7
    %v1280 = vsub.s32 %v1277, %v1279
    %v1281 = vrot.slane %v1274, %v1280
    %v1283 = vmul.f32 %v1271, %v1281
    %v1284 = vadd.f32 %v1264, %v1283
    %1285 = vrot.lane.b32.xlu0 %v1178, 113
    %v1286 = vpop.permute.xlu0 %1285
    %1287 = vrot.lane.b32.xlu0 %v1179, 113
    %v1288 = vpop.permute.xlu0 %1287
    %v1289 = vsel %vm738, %v1286, %v1288
    %v1290 = vsel %vm738, %v1288, %v1286
    %v1291 = vld [vmem:[%s853] sm:$0xf]
    %v1294 = vcombine.low %v1289, %v1290
    %v1296 = vunpack.c.l.s4 1983009808
    %v1297 = vunpack.c.0.s8 %v1296
    %v1298 = vlaneseq
    %v1299 = vshrl.u32 %v1298, 7
    %v1300 = vsub.s32 %v1297, %v1299
    %v1301 = vrot.slane %v1294, %v1300
    %v1303 = vmul.f32 %v1291, %v1301
    %v1304 = vadd.f32 %v1284, %v1303
    %1305 = vrot.lane.b32.xlu0 %v1178, 112
    %v1306 = vpop.permute.xlu0 %1305
    %1307 = vrot.lane.b32.xlu0 %v1179, 112
    %v1308 = vpop.permute.xlu0 %1307
    %v1309 = vsel %vm873, %v1306, %v1308
    %v1310 = vsel %vm873, %v1308, %v1306
    %v1311 = vld [vmem:[%s988] sm:$0xf]
    %v1314 = vcombine.low %v1309, %v1310
    %v1316 = vunpack.c.l.s4 1983009808
    %v1317 = vunpack.c.0.s8 %v1316
    %v1318 = vlaneseq
    %v1319 = vshrl.u32 %v1318, 7
    %v1320 = vsub.s32 %v1317, %v1319
    %v1321 = vrot.slane %v1314, %v1320
    %v1323 = vmul.f32 %v1311, %v1321
    %v1324 = vadd.f32 %v1304, %v1323
    %1325 = vrot.lane.b32.xlu0 %v1178, 111
    %v1326 = vpop.permute.xlu0 %1325
    %1327 = vrot.lane.b32.xlu0 %v1179, 111
    %v1328 = vpop.permute.xlu0 %1327
    %v1329 = vsel %vm1008, %v1326, %v1328
    %v1330 = vsel %vm1008, %v1328, %v1326
    %v1331 = vld [vmem:[%s1123] sm:$0xf]
    %v1334 = vcombine.low %v1329, %v1330
    %v1336 = vunpack.c.l.s4 1983009808
    %v1337 = vunpack.c.0.s8 %v1336
    %v1338 = vlaneseq
    %v1339 = vshrl.u32 %v1338, 7
    %v1340 = vsub.s32 %v1337, %v1339
    %v1341 = vrot.slane %v1334, %v1340
    %v1343 = vmul.f32 %v1331, %v1341
    %v1344 = vadd.f32 %v1324, %v1343
    %v1345 = vld [vmem:[#allocation3] sm:$0xf]
    %vm1346 = vcmp.gt.f32.partialorder %v1344, %v1345
    %v1347 = vsel %vm1346, 1.0, 0.0
  $region22: #{mean_field_forward.1} parent=0 // loop_footer
    %s1169 = sadd.s32 1, %s1165
  $region23: #{mean_field_forward.1} parent=0 // loop_footer_branch
    %1164 = sbr.rel target = $region19
  $region24: #{mean_field_forward.1} parent=0 // loop_exit
    _
  %1348 = vst [vmem:[%s4] sm:$0xf] %v1170
  // Predicated region
  $region25: #{mean_field_forward.1} parent=0 // pred_check
    _
  $region26: #{mean_field_forward.1} parent=0 // pred_check_branch
    %1350 = sbr.rel (0) target = $region28
  $region27: #{mean_field_forward.1} parent=0 // pred_region
    _
  $region28: #{mean_field_forward.1} parent=0 // pred_fallthru
    _
  // Predicated region
  $region29: #{mean_field_forward.1} parent=0 // pred_check
    _
  $region30: #{mean_field_forward.1} parent=0 // pred_check_branch
    %1352 = sbr.rel (0) target = $region32
  $region31: #{mean_field_forward.1} parent=0 // pred_region
    _
  $region32: #{mean_field_forward.1} parent=0 // pred_fallthru
    _

</llo_original>
